<compile_context>
chip_gen: v7x
topology: tpu7x:2x2x1
jax: 0.10.0
libtpu: 0.0.40
codegen_flags: <defaults>
</compile_context>

<pallas_src>
import functools

import jax
import jax.numpy as jnp
from jax.experimental import pallas as pl
from jax.experimental.pallas import tpu as pltpu

_LANE = 128
_SUBLANE = 8
_MAX_BT = 65536  # hard cap on the batch tile
_DEFAULT_PRECISION = jax.lax.Precision.HIGHEST


# ---------------------------------------------------------------------------
# Kernel
# ---------------------------------------------------------------------------
def _mlp_kernel(x_ref, w1_ref, b1_ref, w2_ref, b2_ref, w3_ref, b3_ref, out_ref,
                *, precision):
    # x_ref: (bt, D) in its native batch-major layout (no wrapper transpose).
    x = x_ref[...]
    # Layer 1: contract x's feature axis against w1's "in" axis (transposed-RHS
    # matmul on the MXU): (H, D) x (bt, D) -> (H, bt)  => batch rides the lanes.
    h1 = jax.lax.dot_general(
        w1_ref[...], x, (((1,), (1,)), ((), ())),
        preferred_element_type=jnp.float32, precision=precision)
    h1 = jnp.maximum(h1 + b1_ref[...], 0.0)            # bias (H, 1) over lanes
    # Layer 2: (H, H) @ (H, bt) -> (H, bt)
    h2 = jnp.dot(w2_ref[...], h1,
                 preferred_element_type=jnp.float32, precision=precision)
    h2 = jnp.maximum(h2 + b2_ref[...], 0.0)
    # Head: (O, H) @ (H, bt) -> (O, bt) -- lane-dense output store.
    out = jnp.dot(w3_ref[...], h2,
                  preferred_element_type=jnp.float32, precision=precision)
    out_ref[...] = (out + b3_ref[...]).astype(out_ref.dtype)


# ---------------------------------------------------------------------------
# Tiling / VMEM budgeting helpers
# ---------------------------------------------------------------------------
def _round_up(x, m):
    return (x + m - 1) // m * m


def _tpu_vmem_capacity_bytes():
    try:
        return int(pltpu.get_tpu_info().vmem_capacity_bytes)
    except Exception:
        return 64 * 1024 * 1024  # conservative fallback (v7x-sized VMEM)


def _padded_bytes(rows, cols, itemsize=4):
    # f32 VMEM buffers are laid out in (8, 128) tiles -> pad both dims.
    return _round_up(rows, _SUBLANE) * _round_up(cols, _LANE) * itemsize


def _vmem_need_bytes(D, H, O, bt):
    x_buf = _padded_bytes(bt, D)      # lane-padded (bt, D) input tile
    out_buf = _padded_bytes(O, bt)    # sublane-padded (O, bt) output tile
    acts = 2 * _padded_bytes(H, bt)   # h1 + h2 f32 intermediates
    weights = (_padded_bytes(H, D) + _padded_bytes(H, 1) + _padded_bytes(H, H)
               + _padded_bytes(H, 1) + _padded_bytes(O, H) + _padded_bytes(O, 1))
    # Double-buffered streaming tiles + (conservatively double-buffered)
    # resident weights + intermediates + slack for compiler scratch.
    return 2 * (x_buf + out_buf) + acts + 2 * weights + (2 << 20)


def _pick_cap_bt(D, H, O, budget_bytes):
    """Largest lane-aligned batch tile whose working set fits the VMEM budget."""
    cap = _LANE
    bt = _LANE
    while bt <= _MAX_BT:
        if _vmem_need_bytes(D, H, O, bt) <= budget_bytes:
            cap = bt
        bt += _LANE
    return cap


def _choose_tiling(B, cap_bt):
    """Pick (batch_tile, padded_batch): big tiles, >= 2 grid steps when possible."""
    B128 = _round_up(B, _LANE)
    bt = min(cap_bt, B128)
    if B128 > bt:
        # Prefer a tile that divides the 128-padded batch (avoids extra
        # padding) as long as it stays within 2x of the cap.
        for cand in range(bt, max(bt // 2, _LANE) - 1, -_LANE):
            if B128 % cand == 0:
                bt = cand
                break
    # Guarantee >= 2 grid steps when there is enough work, so the "parallel"
    # grid axis can be sharded across both TensorCores on v7x.
    if B128 // bt < 2 and B128 >= 2 * _LANE:
        bt = _round_up(-(-B128 // 2), _LANE)
    return bt, _round_up(B, bt)


# ---------------------------------------------------------------------------
# Wrapper
# ---------------------------------------------------------------------------
def mlp_forward(x, params, *, batch_tile=None, precision=_DEFAULT_PRECISION):
    """x: (B, D) f32. params: PyTorch-layout weights w*: (out, in), b*: (out, 1)."""
    B, D = x.shape
    H = params["w1"].shape[0]
    O = params["w3"].shape[0]

    vmem_cap = _tpu_vmem_capacity_bytes()
    if batch_tile is None:
        cap_bt = _pick_cap_bt(D, H, O, int(0.6 * vmem_cap))
        bt, B_pad = _choose_tiling(B, cap_bt)
    else:
        bt = int(batch_tile)
        B_pad = _round_up(B, bt)
    assert bt % _LANE == 0 or bt == B_pad, "batch_tile must be a multiple of 128"
    grid = (B_pad // bt,)

    # Zero-pad the batch only when it is not already a multiple of the tile.
    x_in = x if B_pad == B else jnp.pad(x, ((0, B_pad - B), (0, 0)))

    need = _vmem_need_bytes(D, H, O, bt)
    vmem_limit = min(need + (4 << 20), int(0.9 * vmem_cap))
    vmem_limit = max(vmem_limit, need, 16 * 1024 * 1024)  # never below need

    full = lambda shape: pl.BlockSpec(shape, lambda i: (0, 0))

    outT = pl.pallas_call(
        functools.partial(_mlp_kernel, precision=precision),
        out_shape=jax.ShapeDtypeStruct((O, B_pad), jnp.float32),
        grid_spec=pltpu.PrefetchScalarGridSpec(
            num_scalar_prefetch=0,
            grid=grid,
            in_specs=[
                pl.BlockSpec((bt, D), lambda i: (i, 0)),  # x tile, native layout
                full((H, D)),  # w1  (VMEM-resident across the grid)
                full((H, 1)),  # b1
                full((H, H)),  # w2
                full((H, 1)),  # b2
                full((O, H)),  # w3
                full((O, 1)),  # b3
            ],
            out_specs=pl.BlockSpec((O, bt), lambda i: (0, i)),  # lane-dense out
        ),
        compiler_params=pltpu.CompilerParams(
            dimension_semantics=("parallel",),
            vmem_limit_bytes=int(vmem_limit),
        ),
    )(x_in, params["w1"], params["b1"], params["w2"], params["b2"],
      params["w3"], params["b3"])

    out = outT.T  # tiny (O, B_pad) -> (B_pad, O) transpose; x stream untouched
    return out if B_pad == B else out[:B]


# ---------------------------------------------------------------------------
# Params / reference
# ---------------------------------------------------------------------------
def init_mlp_params(key, inp_dim, hid=32, out_dim=2):
    """PyTorch nn.Linear-style init; weights stored (out, in), biases (out, 1)."""
    keys = jax.random.split(key, 6)

    def linear(kw, kb, fan_in, fan_out):
        bound = 1.0 / jnp.sqrt(fan_in)
        w = jax.random.uniform(kw, (fan_out, fan_in), jnp.float32, -bound, bound)
        b = jax.random.uniform(kb, (fan_out, 1), jnp.float32, -bound, bound)
        return w, b

    w1, b1 = linear(keys[0], keys[1], inp_dim, hid)
    w2, b2 = linear(keys[2], keys[3], hid, hid)
    w3, b3 = linear(keys[4], keys[5], hid, out_dim)
    return {"w1": w1, "b1": b1, "w2": w2, "b2": b2, "w3": w3, "b3": b3}


def mlp_reference(x, p, precision=_DEFAULT_PRECISION):
    h1 = jnp.maximum(jnp.dot(x, p["w1"].T, precision=precision) + p["b1"].T, 0.0)
    h2 = jnp.maximum(jnp.dot(h1, p["w2"].T, precision=precision) + p["b2"].T, 0.0)
    return jnp.dot(h2, p["w3"].T, precision=precision) + p["b3"].T


if __name__ == "__main__":
    key = jax.random.PRNGKey(0)
    k_param, k_x = jax.random.split(key)

    batch, inp_dim, hid, out_dim = 256, 16, 32, 2
    params = init_mlp_params(k_param, inp_dim, hid=hid, out_dim=out_dim)
    x = jax.random.normal(k_x, (batch, inp_dim), jnp.float32)

    # Default tiling: batch=256 -> bt=128, 2-step "parallel" grid (exercises
    # both TensorCores on v7x; harmless sequential loop on v5e/v6e).
    out = jax.block_until_ready(mlp_forward(x, params))
    ref = mlp_reference(x, params)
    assert out.shape == (batch, out_dim)
    assert jnp.allclose(out, ref, atol=1e-5, rtol=1e-5)

    # Ragged batch (not a multiple of 128) -> exercises the zero-pad + slice path.
    x2 = jax.random.normal(jax.random.PRNGKey(1), (300, inp_dim), jnp.float32)
    out2 = jax.block_until_ready(mlp_forward(x2, params))
    assert out2.shape == (300, out_dim)
    assert jnp.allclose(out2, mlp_reference(x2, params), atol=1e-5, rtol=1e-5)

    print("KERNEL_OK")
</pallas_src>

<mosaic_0001>
module attributes {stable_mosaic.version = 11 : i64} {
  func.func @_mlp_kernel(%arg0: i32, %arg1: memref<128x16xf32, #tpu.memory_space<vmem>>, %arg2: memref<32x16xf32, #tpu.memory_space<vmem>>, %arg3: memref<32x1xf32, #tpu.memory_space<vmem>>, %arg4: memref<32x32xf32, #tpu.memory_space<vmem>>, %arg5: memref<32x1xf32, #tpu.memory_space<vmem>>, %arg6: memref<2x32xf32, #tpu.memory_space<vmem>>, %arg7: memref<2x1xf32, #tpu.memory_space<vmem>>, %arg8: memref<2x128xf32, #tpu.memory_space<vmem>>) attributes {dimension_semantics = [#tpu.dimension_semantics<parallel>], iteration_bounds = array<i64: 2>, scalar_prefetch = 0 : i64, scratch_operands = 0 : i64, tpu.core_type = #tpu.core_type<tc>, window_params = [{transform_indices = @transform_0, window_bounds = array<i64: 128, 16>}, {pipeline_mode = #tpu.pipeline_mode<synchronous>, transform_indices = @transform_1, window_bounds = array<i64: 32, 16>}, {pipeline_mode = #tpu.pipeline_mode<synchronous>, transform_indices = @transform_2, window_bounds = array<i64: 32, 1>}, {pipeline_mode = #tpu.pipeline_mode<synchronous>, transform_indices = @transform_3, window_bounds = array<i64: 32, 32>}, {pipeline_mode = #tpu.pipeline_mode<synchronous>, transform_indices = @transform_4, window_bounds = array<i64: 32, 1>}, {pipeline_mode = #tpu.pipeline_mode<synchronous>, transform_indices = @transform_5, window_bounds = array<i64: 2, 32>}, {pipeline_mode = #tpu.pipeline_mode<synchronous>, transform_indices = @transform_6, window_bounds = array<i64: 2, 1>}, {transform_indices = @transform_7, window_bounds = array<i64: 2, 128>}]} {
    %c0 = arith.constant 0 : index
    %c0_0 = arith.constant 0 : index
    %0 = vector.load %arg1[%c0, %c0_0] : memref<128x16xf32, #tpu.memory_space<vmem>>, vector<128x16xf32>
    %c0_1 = arith.constant 0 : index
    %c0_2 = arith.constant 0 : index
    %1 = vector.load %arg2[%c0_1, %c0_2] : memref<32x16xf32, #tpu.memory_space<vmem>>, vector<32x16xf32>
    %cst = arith.constant dense<0.000000e+00> : vector<32x128xf32>
    %2 = tpu.matmul %1, %0, %cst {dimension_numbers = #tpu.dot_dimension_numbers<[1], [1], [0], [0], [0, 0, 1, 0], [], []>, precision = #tpu.contract_precision<fp32>} : vector<32x16xf32>, vector<128x16xf32>, vector<32x128xf32> -> vector<32x128xf32>
    %c0_3 = arith.constant 0 : index
    %c0_4 = arith.constant 0 : index
    %3 = vector.load %arg3[%c0_3, %c0_4] : memref<32x1xf32, #tpu.memory_space<vmem>>, vector<32x1xf32>
    %4 = vector.broadcast %3 : vector<32x1xf32> to vector<32x128xf32>
    %5 = arith.addf %2, %4 : vector<32x128xf32>
    %cst_5 = arith.constant 0.000000e+00 : f32
    %6 = vector.broadcast %cst_5 : f32 to vector<32x128xf32>
    %7 = arith.maximumf %5, %6 : vector<32x128xf32>
    %c0_6 = arith.constant 0 : index
    %c0_7 = arith.constant 0 : index
    %8 = vector.load %arg4[%c0_6, %c0_7] : memref<32x32xf32, #tpu.memory_space<vmem>>, vector<32x32xf32>
    %cst_8 = arith.constant dense<0.000000e+00> : vector<32x128xf32>
    %9 = tpu.matmul %8, %7, %cst_8 {dimension_numbers = #tpu.dot_dimension_numbers<[1], [0], [0], [1], [0, 0, 1, 1], [], []>, precision = #tpu.contract_precision<fp32>} : vector<32x32xf32>, vector<32x128xf32>, vector<32x128xf32> -> vector<32x128xf32>
    %c0_9 = arith.constant 0 : index
    %c0_10 = arith.constant 0 : index
    %10 = vector.load %arg5[%c0_9, %c0_10] : memref<32x1xf32, #tpu.memory_space<vmem>>, vector<32x1xf32>
    %11 = vector.broadcast %10 : vector<32x1xf32> to vector<32x128xf32>
    %12 = arith.addf %9, %11 : vector<32x128xf32>
    %cst_11 = arith.constant 0.000000e+00 : f32
    %13 = vector.broadcast %cst_11 : f32 to vector<32x128xf32>
    %14 = arith.maximumf %12, %13 : vector<32x128xf32>
    %c0_12 = arith.constant 0 : index
    %c0_13 = arith.constant 0 : index
    %15 = vector.load %arg6[%c0_12, %c0_13] : memref<2x32xf32, #tpu.memory_space<vmem>>, vector<2x32xf32>
    %cst_14 = arith.constant dense<0.000000e+00> : vector<2x128xf32>
    %16 = tpu.matmul %15, %14, %cst_14 {dimension_numbers = #tpu.dot_dimension_numbers<[1], [0], [0], [1], [0, 0, 1, 1], [], []>, precision = #tpu.contract_precision<fp32>} : vector<2x32xf32>, vector<32x128xf32>, vector<2x128xf32> -> vector<2x128xf32>
    %c0_15 = arith.constant 0 : index
    %c0_16 = arith.constant 0 : index
    %17 = vector.load %arg7[%c0_15, %c0_16] : memref<2x1xf32, #tpu.memory_space<vmem>>, vector<2x1xf32>
    %18 = vector.broadcast %17 : vector<2x1xf32> to vector<2x128xf32>
    %19 = arith.addf %16, %18 : vector<2x128xf32>
    %c0_17 = arith.constant 0 : index
    %c0_18 = arith.constant 0 : index
    %20 = vector.load %arg8[%c0_17, %c0_18] : memref<2x128xf32, #tpu.memory_space<vmem>>, vector<2x128xf32>
    tpu.vector_store %arg8[%c0_17, %c0_18], %19 {strides = array<i32>} : memref<2x128xf32, #tpu.memory_space<vmem>>, vector<2x128xf32>,
    return
  }
  func.func @transform_0(%arg0: i32) -> (i32, i32) {
    %c0_i32 = arith.constant 0 : i32
    %c0_i32_0 = arith.constant 0 : i32
    return %arg0, %c0_i32 : i32, i32
  }
  func.func @transform_1(%arg0: i32) -> (i32, i32) {
    %c0_i32 = arith.constant 0 : i32
    %c0_i32_0 = arith.constant 0 : i32
    %c0_i32_1 = arith.constant 0 : i32
    return %c0_i32, %c0_i32_0 : i32, i32
  }
  func.func @transform_2(%arg0: i32) -> (i32, i32) {
    %c0_i32 = arith.constant 0 : i32
    %c0_i32_0 = arith.constant 0 : i32
    %c0_i32_1 = arith.constant 0 : i32
    return %c0_i32, %c0_i32_0 : i32, i32
  }
  func.func @transform_3(%arg0: i32) -> (i32, i32) {
    %c0_i32 = arith.constant 0 : i32
    %c0_i32_0 = arith.constant 0 : i32
    %c0_i32_1 = arith.constant 0 : i32
    return %c0_i32, %c0_i32_0 : i32, i32
  }
  func.func @transform_4(%arg0: i32) -> (i32, i32) {
    %c0_i32 = arith.constant 0 : i32
    %c0_i32_0 = arith.constant 0 : i32
    %c0_i32_1 = arith.constant 0 : i32
    return %c0_i32, %c0_i32_0 : i32, i32
  }
  func.func @transform_5(%arg0: i32) -> (i32, i32) {
    %c0_i32 = arith.constant 0 : i32
    %c0_i32_0 = arith.constant 0 : i32
    %c0_i32_1 = arith.constant 0 : i32
    return %c0_i32, %c0_i32_0 : i32, i32
  }
  func.func @transform_6(%arg0: i32) -> (i32, i32) {
    %c0_i32 = arith.constant 0 : i32
    %c0_i32_0 = arith.constant 0 : i32
    %c0_i32_1 = arith.constant 0 : i32
    return %c0_i32, %c0_i32_0 : i32, i32
  }
  func.func @transform_7(%arg0: i32) -> (i32, i32) {
    %c0_i32 = arith.constant 0 : i32
    %c0_i32_0 = arith.constant 0 : i32
    return %c0_i32, %arg0 : i32, i32
  }
}

</mosaic_0001>

<llo_original>
// kernel: tpu_custom_call.1
$region0: #{tpu_custom_call.1}
  #allocation0 [shape = 'u32[]', space=smem, size = 0x4, offset = 0x4, fixed_abs, tag = 'smem constant byte address 0x4 - core index']
  #allocation1 [shape = 'u32[144,128]{1,0:T(1,128)}', space=vmem, size = 0x12000, scoped, tag = 'internal scratch']
  %s0 = inlined_call_operand.vmem [shape: f32[256,16], index: 0, kind: input, shape index: {}]
  %s1 = inlined_call_operand.vmem [shape: f32[32,16], index: 1, kind: input, shape index: {}]
  %s2 = inlined_call_operand.vmem [shape: f32[32,1], index: 2, kind: input, shape index: {}]
  %s3 = inlined_call_operand.vmem [shape: f32[32,32], index: 3, kind: input, shape index: {}]
  %s4 = inlined_call_operand.vmem [shape: f32[32,1], index: 4, kind: input, shape index: {}]
  %s5 = inlined_call_operand.vmem [shape: f32[2,32], index: 5, kind: input, shape index: {}]
  %s6 = inlined_call_operand.vmem [shape: f32[2,1], index: 6, kind: input, shape index: {}]
  %s7 = inlined_call_operand.hbm [shape: f32[2,256], index: 7, kind: output, shape index: {}]
  %s8 = sld [smem:[#allocation0]]
  $region61: #{tpu_custom_call.1} parent=0
    _
  %s10 = ssub.s32 1, %s8
  %s11 = scalar_select 0, %s10, %s8
  $region1: #{tpu_custom_call.1} parent=0
    #allocation2 [shape = 'u8[2048]{0}', space=vmem, size = 0x800, scoped, tag = 'output window, operand 0']
    #allocation3 [shape = 's32[2]{0}', space=sflag, size = 0x8, scoped, tag = 'scoped memory for tpu_custom_call.1']
    %12 = vsyncpa [#allocation3], 0
    %s13 = scalar_lea.sflag [#allocation3], 1
    %14 = vsyncpa %s13, 0
    loop: start=0, step=1, limit=4
    $region2: #{tpu_custom_call.1} parent=1 // loop_pre_header
      _
    $region3: #{tpu_custom_call.1} parent=1 // loop_header
      %s16 = sphi 0, %s20
      %p17 = scmp.ge.s32.totalorder %s16, 4
      %s26 = sphi 0, %s28
      %s29 = sphi 0, %s26
      %s30 = sphi 0, %s29
      %s46 = sphi 0, %s30
      %s50 = sphi 0, %s50
      %s52 = sphi 0, %s50
      %s53 = sphi 0, %s52
      %s67 = sphi 0, %s53
      %s71 = sphi 0, %s71
      %s73 = sphi 0, %s71
      %s74 = sphi 0, %s73
      %s88 = sphi 0, %s74
      %s92 = sphi 0, %s92
      %s94 = sphi 0, %s92
      %s95 = sphi 0, %s94
      %s109 = sphi 0, %s95
      %s113 = sphi 0, %s113
      %s115 = sphi 0, %s113
      %s116 = sphi 0, %s115
      %s130 = sphi 0, %s116
      %s134 = sphi 0, %s134
      %s136 = sphi 0, %s134
      %s137 = sphi 0, %s136
      %s151 = sphi 0, %s137
      %s155 = sphi 0, %s155
      %s157 = sphi 0, %s155
      %s158 = sphi 0, %s157
      %s172 = sphi 0, %s158
      %s178 = sphi 0, %s180
      %s181 = sphi 0, %s178
      %s182 = sphi 0, %s181
      %s198 = sphi 0, %s182
    $region4: #{tpu_custom_call.1} parent=1 // loop_header_branch
      %19 = sbr.rel (%p17) target = $region8
    $region5: #{tpu_custom_call.1} parent=1 // loop_body
      %s21 = ssub.s32 %s16, 1
      %s22 = ssub.s32 %s16, 2
      %s23 = sadd.s32 %s16, 1
      %s24 = ssub.s32 %s16, %s23
      %p25 = scmp.eq.s32.totalorder %s24, 0
      %s27 = sadd.s32 %s26, 1
      %s28 = scalar_select %p25, %s26, %s27
      %p31 = pneg %p25
      %p32 = scmp.eq.s32.totalorder %s16, 1
      %p33 = por %p31, %p32
      %p34 = scmp.ne.s32.totalorder %s26, %s29
      %p35 = scmp.eq.s32.totalorder %s16, 0
      %p36 = por %p34, %p35
      %p37 = scmp.ne.s32.totalorder %s26, %s29
      %p38 = scmp.eq.s32.totalorder %s21, 1
      %p39 = por %p37, %p38
      %p40 = scmp.ne.s32.totalorder %s29, %s30
      %p41 = scmp.eq.s32.totalorder %s21, 0
      %p42 = por %p40, %p41
      %p43 = scmp.ne.s32.totalorder %s29, %s30
      %p44 = scmp.eq.s32.totalorder %s22, 1
      %p45 = por %p43, %p44
      %p47 = scmp.ne.s32.totalorder %s30, %s46
      %p48 = scmp.eq.s32.totalorder %s22, 0
      %p49 = por %p47, %p48
      %s51 = sadd.s32 %s50, 1
      %p54 = scmp.eq.s32.totalorder %s16, 1
      %p55 = scmp.ne.s32.totalorder %s50, %s52
      %p56 = scmp.eq.s32.totalorder %s16, 0
      %p57 = por %p55, %p56
      %p58 = scmp.ne.s32.totalorder %s50, %s52
      %p59 = scmp.eq.s32.totalorder %s21, 1
      %p60 = por %p58, %p59
      %p61 = scmp.ne.s32.totalorder %s52, %s53
      %p62 = scmp.eq.s32.totalorder %s21, 0
      %p63 = por %p61, %p62
      %p64 = scmp.ne.s32.totalorder %s52, %s53
      %p65 = scmp.eq.s32.totalorder %s22, 1
      %p66 = por %p64, %p65
      %p68 = scmp.ne.s32.totalorder %s53, %s67
      %p69 = scmp.eq.s32.totalorder %s22, 0
      %p70 = por %p68, %p69
      %s72 = sadd.s32 %s71, 1
      %p75 = scmp.eq.s32.totalorder %s16, 1
      %p76 = scmp.ne.s32.totalorder %s71, %s73
      %p77 = scmp.eq.s32.totalorder %s16, 0
      %p78 = por %p76, %p77
      %p79 = scmp.ne.s32.totalorder %s71, %s73
      %p80 = scmp.eq.s32.totalorder %s21, 1
      %p81 = por %p79, %p80
      %p82 = scmp.ne.s32.totalorder %s73, %s74
      %p83 = scmp.eq.s32.totalorder %s21, 0
      %p84 = por %p82, %p83
      %p85 = scmp.ne.s32.totalorder %s73, %s74
      %p86 = scmp.eq.s32.totalorder %s22, 1
      %p87 = por %p85, %p86
      %p89 = scmp.ne.s32.totalorder %s74, %s88
      %p90 = scmp.eq.s32.totalorder %s22, 0
      %p91 = por %p89, %p90
      %s93 = sadd.s32 %s92, 1
      %p96 = scmp.eq.s32.totalorder %s16, 1
      %p97 = scmp.ne.s32.totalorder %s92, %s94
      %p98 = scmp.eq.s32.totalorder %s16, 0
      %p99 = por %p97, %p98
      %p100 = scmp.ne.s32.totalorder %s92, %s94
      %p101 = scmp.eq.s32.totalorder %s21, 1
      %p102 = por %p100, %p101
      %p103 = scmp.ne.s32.totalorder %s94, %s95
      %p104 = scmp.eq.s32.totalorder %s21, 0
      %p105 = por %p103, %p104
      %p106 = scmp.ne.s32.totalorder %s94, %s95
      %p107 = scmp.eq.s32.totalorder %s22, 1
      %p108 = por %p106, %p107
      %p110 = scmp.ne.s32.totalorder %s95, %s109
      %p111 = scmp.eq.s32.totalorder %s22, 0
      %p112 = por %p110, %p111
      %s114 = sadd.s32 %s113, 1
      %p117 = scmp.eq.s32.totalorder %s16, 1
      %p118 = scmp.ne.s32.totalorder %s113, %s115
      %p119 = scmp.eq.s32.totalorder %s16, 0
      %p120 = por %p118, %p119
      %p121 = scmp.ne.s32.totalorder %s113, %s115
      %p122 = scmp.eq.s32.totalorder %s21, 1
      %p123 = por %p121, %p122
      %p124 = scmp.ne.s32.totalorder %s115, %s116
      %p125 = scmp.eq.s32.totalorder %s21, 0
      %p126 = por %p124, %p125
      %p127 = scmp.ne.s32.totalorder %s115, %s116
      %p128 = scmp.eq.s32.totalorder %s22, 1
      %p129 = por %p127, %p128
      %p131 = scmp.ne.s32.totalorder %s116, %s130
      %p132 = scmp.eq.s32.totalorder %s22, 0
      %p133 = por %p131, %p132
      %s135 = sadd.s32 %s134, 1
      %p138 = scmp.eq.s32.totalorder %s16, 1
      %p139 = scmp.ne.s32.totalorder %s134, %s136
      %p140 = scmp.eq.s32.totalorder %s16, 0
      %p141 = por %p139, %p140
      %p142 = scmp.ne.s32.totalorder %s134, %s136
      %p143 = scmp.eq.s32.totalorder %s21, 1
      %p144 = por %p142, %p143
      %p145 = scmp.ne.s32.totalorder %s136, %s137
      %p146 = scmp.eq.s32.totalorder %s21, 0
      %p147 = por %p145, %p146
      %p148 = scmp.ne.s32.totalorder %s136, %s137
      %p149 = scmp.eq.s32.totalorder %s22, 1
      %p150 = por %p148, %p149
      %p152 = scmp.ne.s32.totalorder %s137, %s151
      %p153 = scmp.eq.s32.totalorder %s22, 0
      %p154 = por %p152, %p153
      %s156 = sadd.s32 %s155, 1
      %p159 = scmp.eq.s32.totalorder %s16, 1
      %p160 = scmp.ne.s32.totalorder %s155, %s157
      %p161 = scmp.eq.s32.totalorder %s16, 0
      %p162 = por %p160, %p161
      %p163 = scmp.ne.s32.totalorder %s155, %s157
      %p164 = scmp.eq.s32.totalorder %s21, 1
      %p165 = por %p163, %p164
      %p166 = scmp.ne.s32.totalorder %s157, %s158
      %p167 = scmp.eq.s32.totalorder %s21, 0
      %p168 = por %p166, %p167
      %p169 = scmp.ne.s32.totalorder %s157, %s158
      %p170 = scmp.eq.s32.totalorder %s22, 1
      %p171 = por %p169, %p170
      %p173 = scmp.ne.s32.totalorder %s158, %s172
      %p174 = scmp.eq.s32.totalorder %s22, 0
      %p175 = por %p173, %p174
      %s176 = ssub.s32 %s16, %s23
      %p177 = scmp.eq.s32.totalorder %s176, 0
      %s179 = sadd.s32 %s178, 1
      %s180 = scalar_select %p177, %s178, %s179
      %p183 = pneg %p177
      %p184 = scmp.eq.s32.totalorder %s16, 1
      %p185 = por %p183, %p184
      %p186 = scmp.ne.s32.totalorder %s178, %s181
      %p187 = scmp.eq.s32.totalorder %s16, 0
      %p188 = por %p186, %p187
      %p189 = scmp.ne.s32.totalorder %s178, %s181
      %p190 = scmp.eq.s32.totalorder %s21, 1
      %p191 = por %p189, %p190
      %p192 = scmp.ne.s32.totalorder %s181, %s182
      %p193 = scmp.eq.s32.totalorder %s21, 0
      %p194 = por %p192, %p193
      %p195 = scmp.ne.s32.totalorder %s181, %s182
      %p196 = scmp.eq.s32.totalorder %s22, 1
      %p197 = por %p195, %p196
      %p199 = scmp.ne.s32.totalorder %s182, %s198
      %p200 = scmp.eq.s32.totalorder %s22, 0
      %p201 = por %p199, %p200
      %p202 = scmp.le.s32.totalorder 1, %s16
      %p203 = scmp.lt.s32.totalorder %s16, 3
      %p204 = pnand %p202, %p203
      %p205 = pneg %p204
      // Predicated region
      $region9: #{tpu_custom_call.1} parent=5 // pred_check
        _
      $region10: #{tpu_custom_call.1} parent=5 // pred_check_branch
        %207 = sbr.rel (%p204) target = $region12
      $region11: #{tpu_custom_call.1} parent=5 // pred_region
        %s208 = ssub.s32 %s16, 1
        // Predicated region
        $region13: #{tpu_custom_call.1} parent=11 // pred_check
          %p209 = pneg %p63
        $region14: #{tpu_custom_call.1} parent=11 // pred_check_branch
          %211 = sbr.rel (%p209) target = $region16
        $region15: #{tpu_custom_call.1} parent=11 // pred_region
          _
        $region16: #{tpu_custom_call.1} parent=11 // pred_fallthru
          _
        // Predicated region
        $region17: #{tpu_custom_call.1} parent=11 // pred_check
          %p212 = pneg %p84
        $region18: #{tpu_custom_call.1} parent=11 // pred_check_branch
          %214 = sbr.rel (%p212) target = $region20
        $region19: #{tpu_custom_call.1} parent=11 // pred_region
          _
        $region20: #{tpu_custom_call.1} parent=11 // pred_fallthru
          _
        // Predicated region
        $region21: #{tpu_custom_call.1} parent=11 // pred_check
          %p215 = pneg %p105
        $region22: #{tpu_custom_call.1} parent=11 // pred_check_branch
          %217 = sbr.rel (%p215) target = $region24
        $region23: #{tpu_custom_call.1} parent=11 // pred_region
          _
        $region24: #{tpu_custom_call.1} parent=11 // pred_fallthru
          _
        // Predicated region
        $region25: #{tpu_custom_call.1} parent=11 // pred_check
          %p218 = pneg %p126
        $region26: #{tpu_custom_call.1} parent=11 // pred_check_branch
          %220 = sbr.rel (%p218) target = $region28
        $region27: #{tpu_custom_call.1} parent=11 // pred_region
          _
        $region28: #{tpu_custom_call.1} parent=11 // pred_fallthru
          _
        // Predicated region
        $region29: #{tpu_custom_call.1} parent=11 // pred_check
          %p221 = pneg %p147
        $region30: #{tpu_custom_call.1} parent=11 // pred_check_branch
          %223 = sbr.rel (%p221) target = $region32
        $region31: #{tpu_custom_call.1} parent=11 // pred_region
          _
        $region32: #{tpu_custom_call.1} parent=11 // pred_fallthru
          _
        // Predicated region
        $region33: #{tpu_custom_call.1} parent=11 // pred_check
          %p224 = pneg %p168
        $region34: #{tpu_custom_call.1} parent=11 // pred_check_branch
          %226 = sbr.rel (%p224) target = $region36
        $region35: #{tpu_custom_call.1} parent=11 // pred_region
          _
        $region36: #{tpu_custom_call.1} parent=11 // pred_fallthru
          _
      $region12: #{tpu_custom_call.1} parent=5 // pred_fallthru
        _
      %p227 = scmp.lt.s32.totalorder %s16, 2
      // Predicated region
      $region37: #{tpu_custom_call.1} parent=5 // pred_check
        %p228 = pneg %p227
      $region38: #{tpu_custom_call.1} parent=5 // pred_check_branch
        %230 = sbr.rel (%p228) target = $region40
      $region39: #{tpu_custom_call.1} parent=5 // pred_region
        // Predicated region
        $region41: #{tpu_custom_call.1} parent=39 // pred_check
          %p231 = pneg %p36
        $region42: #{tpu_custom_call.1} parent=39 // pred_check_branch
          %233 = sbr.rel (%p231) target = $region44
        $region43: #{tpu_custom_call.1} parent=39 // pred_region
          %s234 = smul.u32 16, %s16
          %p235 = scmp.lt.s32.totalorder %s234, 31
          %s236 = scalar_select %p235, %s234, 31
          %s237 = smul.addr %s236, 8
          %s238 = scalar_lea.vmem %s0, %s237
          %s239 = smul.u32 16, %s16
        $region44: #{tpu_custom_call.1} parent=39 // pred_fallthru
          _
      $region40: #{tpu_custom_call.1} parent=5 // pred_fallthru
        _
      %p240 = scmp.le.s32.totalorder 1, %s16
      %p241 = scmp.lt.s32.totalorder %s16, 3
      %p242 = pnand %p240, %p241
      %p243 = pneg %p242
      // Predicated region
      $region45: #{tpu_custom_call.1} parent=5 // pred_check
        _
      $region46: #{tpu_custom_call.1} parent=5 // pred_check_branch
        %245 = sbr.rel (%p242) target = $region48
      $region47: #{tpu_custom_call.1} parent=5 // pred_region
        %s246 = ssub.s32 %s16, 1
        %s247 = smul.u32 16, %s21
        %p248 = scmp.lt.s32.totalorder %s247, 31
        %s249 = scalar_select %p248, %s247, 31
        %s250 = smul.addr %s249, 8
        %s251 = scalar_lea.vmem %s0, %s250
        %p252 = pneg %p42
        %p253 = pneg %p39
        %p254 = pneg %p63
        %p255 = pneg %p60
        %p256 = pneg %p84
        %p257 = pneg %p81
        %p258 = pneg %p105
        %p259 = pneg %p102
        %p260 = pneg %p126
        %p261 = pneg %p123
        %p262 = pneg %p147
        %p263 = pneg %p144
        %p264 = pneg %p168
        %p265 = pneg %p165
        %p266 = pneg %p194
        %p267 = pneg %p191
        %s268 = sand.u32 %s181, 1
        %s269 = scalar_lea.sflag [#allocation3], %s268
        %s270 = sand.u32 %s181, 1
        %s271 = smul.addr %s270, 2
        %s272 = scalar_lea.vmem [#allocation2], %s271
        %s273 = smul.u32 16, %s21
        %p274 = scmp.lt.s32.totalorder %s273, 31
        %s275 = scalar_select %p274, %s273, 31
        %s276 = smul.addr %s275, 8
        %s277 = scalar_lea.vmem %s0, %s276
        %s278 = smul.u32 16, %s21
        %v279 = vld [vmem:[%s277] sm:$0xff]
        %v280 = vld [vmem:[%s277 + $0x8] sm:$0xff]
        %v281 = vld [vmem:[%s277 + $0x10] sm:$0xff]
        %v282 = vld [vmem:[%s277 + $0x18] sm:$0xff]
        %v283 = vld [vmem:[%s277 + $0x20] sm:$0xff]
        %v284 = vld [vmem:[%s277 + $0x28] sm:$0xff]
        %v285 = vld [vmem:[%s277 + $0x30] sm:$0xff]
        %v286 = vld [vmem:[%s277 + $0x38] sm:$0xff]
        %v287 = vld [vmem:[%s277 + $0x40] sm:$0xff]
        %v288 = vld [vmem:[%s277 + $0x48] sm:$0xff]
        %v289 = vld [vmem:[%s277 + $0x50] sm:$0xff]
        %v290 = vld [vmem:[%s277 + $0x58] sm:$0xff]
        %v291 = vld [vmem:[%s277 + $0x60] sm:$0xff]
        %v292 = vld [vmem:[%s277 + $0x68] sm:$0xff]
        %v293 = vld [vmem:[%s277 + $0x70] sm:$0xff]
        %v294 = vld [vmem:[%s277 + $0x78] sm:$0xff]
        %v295 = vld [vmem:[%s1] sm:$0xff]
        %v296 = vld [vmem:[%s1 + $0x8] sm:$0xff]
        %v297 = vld [vmem:[%s1 + $0x10] sm:$0xff]
        %v298 = vld [vmem:[%s1 + $0x18] sm:$0xff]
        %v299 = vld [vmem:[%s2] sm:$0xff]
        %v300 = vld [vmem:[%s2 + $0x8] sm:$0xff]
        %v301 = vld [vmem:[%s2 + $0x10] sm:$0xff]
        %v302 = vld [vmem:[%s2 + $0x18] sm:$0xff]
        %304 = vset.pattern.permute.xlu0 0
        %305 = vperm.xlu0 %304, %v299
        %v306 = vpop.permute.xlu0 %305
        %309 = vset.pattern.permute.xlu0 0
        %310 = vperm.xlu0 %309, %v300
        %v311 = vpop.permute.xlu0 %310
        %314 = vset.pattern.permute.xlu0 0
        %315 = vperm.xlu0 %314, %v301
        %v316 = vpop.permute.xlu0 %315
        %319 = vset.pattern.permute.xlu0 0
        %320 = vperm.xlu0 %319, %v302
        %v321 = vpop.permute.xlu0 %320
        %vm323 = vcmask 130048
        %v325 = vsel %vm323, %v295, 0
        %v328 = vsel %vm323, %v296, 0
        %v331 = vsel %vm323, %v297, 0
        %v334 = vsel %vm323, %v298, 0
        %v337 = vsel %vm323, %v279, 0
        %v340 = vsel %vm323, %v280, 0
        %v343 = vsel %vm323, %v281, 0
        %v346 = vsel %vm323, %v282, 0
        %v349 = vsel %vm323, %v283, 0
        %v352 = vsel %vm323, %v284, 0
        %v355 = vsel %vm323, %v285, 0
        %v358 = vsel %vm323, %v286, 0
        %v361 = vsel %vm323, %v287, 0
        %v364 = vsel %vm323, %v288, 0
        %v367 = vsel %vm323, %v289, 0
        %v370 = vsel %vm323, %v290, 0
        %v373 = vsel %vm323, %v291, 0
        %v376 = vsel %vm323, %v292, 0
        %v379 = vsel %vm323, %v293, 0
        %v382 = vsel %vm323, %v294, 0
        %384 = vmatprep.subr.mxu0 0.0
        %v385 = vand.u32 %v337, 4294901760
        %386 = vmatpush1.xpose.msra.mxu0 %v385
        %387 = vmatprep.subr.mxu0 0.0
        %v388 = vand.u32 %v340, 4294901760
        %389 = vmatpush1.xpose.msra.mxu0 %v388
        %390 = vmatprep.subr.mxu0 0.0
        %v391 = vand.u32 %v343, 4294901760
        %392 = vmatpush1.xpose.msra.mxu0 %v391
        %393 = vmatprep.subr.mxu0 0.0
        %v394 = vand.u32 %v346, 4294901760
        %395 = vmatpush1.xpose.msra.mxu0 %v394
        %396 = vmatprep.subr.mxu0 0.0
        %v397 = vand.u32 %v349, 4294901760
        %398 = vmatpush1.xpose.msra.mxu0 %v397
        %399 = vmatprep.subr.mxu0 0.0
        %v400 = vand.u32 %v352, 4294901760
        %401 = vmatpush1.xpose.msra.mxu0 %v400
        %402 = vmatprep.subr.mxu0 0.0
        %v403 = vand.u32 %v355, 4294901760
        %404 = vmatpush1.xpose.msra.mxu0 %v403
        %405 = vmatprep.subr.mxu0 0.0
        %v406 = vand.u32 %v358, 4294901760
        %407 = vmatpush1.xpose.msra.mxu0 %v406
        %408 = vmatprep.subr.mxu0 0.0
        %v409 = vand.u32 %v361, 4294901760
        %410 = vmatpush1.xpose.msra.mxu0 %v409
        %411 = vmatprep.subr.mxu0 0.0
        %v412 = vand.u32 %v364, 4294901760
        %413 = vmatpush1.xpose.msra.mxu0 %v412
        %414 = vmatprep.subr.mxu0 0.0
        %v415 = vand.u32 %v367, 4294901760
        %416 = vmatpush1.xpose.msra.mxu0 %v415
        %417 = vmatprep.subr.mxu0 0.0
        %v418 = vand.u32 %v370, 4294901760
        %419 = vmatpush1.xpose.msra.mxu0 %v418
        %420 = vmatprep.subr.mxu0 0.0
        %v421 = vand.u32 %v373, 4294901760
        %422 = vmatpush1.xpose.msra.mxu0 %v421
        %423 = vmatprep.subr.mxu0 0.0
        %v424 = vand.u32 %v376, 4294901760
        %425 = vmatpush1.xpose.msra.mxu0 %v424
        %426 = vmatprep.subr.mxu0 0.0
        %v427 = vand.u32 %v379, 4294901760
        %428 = vmatpush1.xpose.msra.mxu0 %v427
        %429 = vmatprep.subr.mxu0 0.0
        %v430 = vand.u32 %v382, 4294901760
        %431 = vmatpush1.xpose.msra.mxu0 %v430
        %432 = vmatprep.subr.mxu0 0.0
        %433 = vmatpush1.xpose.msra.mxu0 0.0
        %434 = vmatprep.subr.mxu0 0.0
        %435 = vmatpush1.xpose.msra.mxu0 0.0
        %436 = vmatprep.subr.mxu0 0.0
        %437 = vmatpush1.xpose.msra.mxu0 0.0
        %438 = vmatprep.subr.mxu0 0.0
        %439 = vmatpush1.xpose.msra.mxu0 0.0
        %440 = vmatprep.subr.mxu0 0.0
        %441 = vmatpush1.xpose.msra.mxu0 0.0
        %442 = vmatprep.subr.mxu0 0.0
        %443 = vmatpush1.xpose.msra.mxu0 0.0
        %444 = vmatprep.subr.mxu0 0.0
        %445 = vmatpush1.xpose.msra.mxu0 0.0
        %446 = vmatprep.subr.mxu0 0.0
        %447 = vmatpush1.xpose.msra.mxu0 0.0
        %448 = vmatprep.subr.mxu0 0.0
        %449 = vmatpush1.xpose.msra.mxu0 0.0
        %450 = vmatprep.subr.mxu0 0.0
        %451 = vmatpush1.xpose.msra.mxu0 0.0
        %452 = vmatprep.subr.mxu0 0.0
        %453 = vmatpush1.xpose.msra.mxu0 0.0
        %454 = vmatprep.subr.mxu0 0.0
        %455 = vmatpush1.xpose.msra.mxu0 0.0
        %456 = vmatprep.subr.mxu0 0.0
        %457 = vmatpush1.xpose.msra.mxu0 0.0
        %458 = vmatprep.subr.mxu0 0.0
        %459 = vmatpush1.xpose.msra.mxu0 0.0
        %460 = vmatprep.subr.mxu0 0.0
        %461 = vmatpush1.xpose.msra.mxu0 0.0
        %462 = vmatprep.subr.mxu0 0.0
        %463 = vmatpush1.xpose.msra.mxu0 0.0
        %464 = vmatprep.mubr.f32.mxu0 0.0
        %v465 = vand.u32 %v325, 4294901760
        %v466 = vsub.f32 %v325, %v465
        %v467 = vand.u32 %v466, 4294901760
        %v468 = vsub.f32 %v466, %v467
        %v469 = vand.u32 %v468, 4294901760
        %470 = vmatmul.mubr.f32.gmra.mrb[0].mxu0 %v469
        %v471 = vpop.f32.mrb[0].mxu0
        %v472 = vadd.f32 %v306, %v471
        %v473 = vpop.f32.mrb[0].mxu0
        %474 = vmatprep.mubr.f32.mxu0 0.0
        %v475 = vand.u32 %v328, 4294901760
        %v476 = vsub.f32 %v328, %v475
        %v477 = vand.u32 %v476, 4294901760
        %v478 = vsub.f32 %v476, %v477
        %v479 = vand.u32 %v478, 4294901760
        %480 = vmatmul.mubr.f32.gmra.mrb[0].mxu0 %v479
        %v481 = vpop.f32.mrb[0].mxu0
        %v482 = vadd.f32 %v311, %v481
        %v483 = vpop.f32.mrb[0].mxu0
        %484 = vmatprep.mubr.f32.mxu0 0.0
        %v485 = vand.u32 %v331, 4294901760
        %v486 = vsub.f32 %v331, %v485
        %v487 = vand.u32 %v486, 4294901760
        %v488 = vsub.f32 %v486, %v487
        %v489 = vand.u32 %v488, 4294901760
        %490 = vmatmul.mubr.f32.gmra.mrb[0].mxu0 %v489
        %v491 = vpop.f32.mrb[0].mxu0
        %v492 = vadd.f32 %v316, %v491
        %v493 = vpop.f32.mrb[0].mxu0
        %494 = vmatprep.mubr.f32.mxu0 0.0
        %v495 = vand.u32 %v334, 4294901760
        %v496 = vsub.f32 %v334, %v495
        %v497 = vand.u32 %v496, 4294901760
        %v498 = vsub.f32 %v496, %v497
        %v499 = vand.u32 %v498, 4294901760
        %500 = vmatmul.mubr.f32.gmra.mrb[0].mxu0 %v499
        %v501 = vpop.f32.mrb[0].mxu0
        %v502 = vadd.f32 %v321, %v501
        %v503 = vpop.f32.mrb[0].mxu0
        %504 = vdwg.mxu0
        %505 = vmatprep.subr.mxu0 0.0
        %v506 = vand.u32 %v337, 4294901760
        %v507 = vsub.f32 %v337, %v506
        %v508 = vand.u32 %v507, 4294901760
        %v509 = vsub.f32 %v507, %v508
        %v510 = vand.u32 %v509, 4294901760
        %511 = vmatpush1.xpose.msra.mxu0 %v510
        %512 = vmatprep.subr.mxu0 0.0
        %v513 = vand.u32 %v340, 4294901760
        %v514 = vsub.f32 %v340, %v513
        %v515 = vand.u32 %v514, 4294901760
        %v516 = vsub.f32 %v514, %v515
        %v517 = vand.u32 %v516, 4294901760
        %518 = vmatpush1.xpose.msra.mxu0 %v517
        %519 = vmatprep.subr.mxu0 0.0
        %v520 = vand.u32 %v343, 4294901760
        %v521 = vsub.f32 %v343, %v520
        %v522 = vand.u32 %v521, 4294901760
        %v523 = vsub.f32 %v521, %v522
        %v524 = vand.u32 %v523, 4294901760
        %525 = vmatpush1.xpose.msra.mxu0 %v524
        %526 = vmatprep.subr.mxu0 0.0
        %v527 = vand.u32 %v346, 4294901760
        %v528 = vsub.f32 %v346, %v527
        %v529 = vand.u32 %v528, 4294901760
        %v530 = vsub.f32 %v528, %v529
        %v531 = vand.u32 %v530, 4294901760
        %532 = vmatpush1.xpose.msra.mxu0 %v531
        %533 = vmatprep.subr.mxu0 0.0
        %v534 = vand.u32 %v349, 4294901760
        %v535 = vsub.f32 %v349, %v534
        %v536 = vand.u32 %v535, 4294901760
        %v537 = vsub.f32 %v535, %v536
        %v538 = vand.u32 %v537, 4294901760
        %539 = vmatpush1.xpose.msra.mxu0 %v538
        %540 = vmatprep.subr.mxu0 0.0
        %v541 = vand.u32 %v352, 4294901760
        %v542 = vsub.f32 %v352, %v541
        %v543 = vand.u32 %v542, 4294901760
        %v544 = vsub.f32 %v542, %v543
        %v545 = vand.u32 %v544, 4294901760
        %546 = vmatpush1.xpose.msra.mxu0 %v545
        %547 = vmatprep.subr.mxu0 0.0
        %v548 = vand.u32 %v355, 4294901760
        %v549 = vsub.f32 %v355, %v548
        %v550 = vand.u32 %v549, 4294901760
        %v551 = vsub.f32 %v549, %v550
        %v552 = vand.u32 %v551, 4294901760
        %553 = vmatpush1.xpose.msra.mxu0 %v552
        %554 = vmatprep.subr.mxu0 0.0
        %v555 = vand.u32 %v358, 4294901760
        %v556 = vsub.f32 %v358, %v555
        %v557 = vand.u32 %v556, 4294901760
        %v558 = vsub.f32 %v556, %v557
        %v559 = vand.u32 %v558, 4294901760
        %560 = vmatpush1.xpose.msra.mxu0 %v559
        %561 = vmatprep.subr.mxu0 0.0
        %v562 = vand.u32 %v361, 4294901760
        %v563 = vsub.f32 %v361, %v562
        %v564 = vand.u32 %v563, 4294901760
        %v565 = vsub.f32 %v563, %v564
        %v566 = vand.u32 %v565, 4294901760
        %567 = vmatpush1.xpose.msra.mxu0 %v566
        %568 = vmatprep.subr.mxu0 0.0
        %v569 = vand.u32 %v364, 4294901760
        %v570 = vsub.f32 %v364, %v569
        %v571 = vand.u32 %v570, 4294901760
        %v572 = vsub.f32 %v570, %v571
        %v573 = vand.u32 %v572, 4294901760
        %574 = vmatpush1.xpose.msra.mxu0 %v573
        %575 = vmatprep.subr.mxu0 0.0
        %v576 = vand.u32 %v367, 4294901760
        %v577 = vsub.f32 %v367, %v576
        %v578 = vand.u32 %v577, 4294901760
        %v579 = vsub.f32 %v577, %v578
        %v580 = vand.u32 %v579, 4294901760
        %581 = vmatpush1.xpose.msra.mxu0 %v580
        %582 = vmatprep.subr.mxu0 0.0
        %v583 = vand.u32 %v370, 4294901760
        %v584 = vsub.f32 %v370, %v583
        %v585 = vand.u32 %v584, 4294901760
        %v586 = vsub.f32 %v584, %v585
        %v587 = vand.u32 %v586, 4294901760
        %588 = vmatpush1.xpose.msra.mxu0 %v587
        %589 = vmatprep.subr.mxu0 0.0
        %v590 = vand.u32 %v373, 4294901760
        %v591 = vsub.f32 %v373, %v590
        %v592 = vand.u32 %v591, 4294901760
        %v593 = vsub.f32 %v591, %v592
        %v594 = vand.u32 %v593, 4294901760
        %595 = vmatpush1.xpose.msra.mxu0 %v594
        %596 = vmatprep.subr.mxu0 0.0
        %v597 = vand.u32 %v376, 4294901760
        %v598 = vsub.f32 %v376, %v597
        %v599 = vand.u32 %v598, 4294901760
        %v600 = vsub.f32 %v598, %v599
        %v601 = vand.u32 %v600, 4294901760
        %602 = vmatpush1.xpose.msra.mxu0 %v601
        %603 = vmatprep.subr.mxu0 0.0
        %v604 = vand.u32 %v379, 4294901760
        %v605 = vsub.f32 %v379, %v604
        %v606 = vand.u32 %v605, 4294901760
        %v607 = vsub.f32 %v605, %v606
        %v608 = vand.u32 %v607, 4294901760
        %609 = vmatpush1.xpose.msra.mxu0 %v608
        %610 = vmatprep.subr.mxu0 0.0
        %v611 = vand.u32 %v382, 4294901760
        %v612 = vsub.f32 %v382, %v611
        %v613 = vand.u32 %v612, 4294901760
        %v614 = vsub.f32 %v612, %v613
        %v615 = vand.u32 %v614, 4294901760
        %616 = vmatpush1.xpose.msra.mxu0 %v615
        %617 = vmatprep.subr.mxu0 0.0
        %618 = vmatpush1.xpose.msra.mxu0 0.0
        %619 = vmatprep.subr.mxu0 0.0
        %620 = vmatpush1.xpose.msra.mxu0 0.0
        %621 = vmatprep.subr.mxu0 0.0
        %622 = vmatpush1.xpose.msra.mxu0 0.0
        %623 = vmatprep.subr.mxu0 0.0
        %624 = vmatpush1.xpose.msra.mxu0 0.0
        %625 = vmatprep.subr.mxu0 0.0
        %626 = vmatpush1.xpose.msra.mxu0 0.0
        %627 = vmatprep.subr.mxu0 0.0
        %628 = vmatpush1.xpose.msra.mxu0 0.0
        %629 = vmatprep.subr.mxu0 0.0
        %630 = vmatpush1.xpose.msra.mxu0 0.0
        %631 = vmatprep.subr.mxu0 0.0
        %632 = vmatpush1.xpose.msra.mxu0 0.0
        %633 = vmatprep.subr.mxu0 0.0
        %634 = vmatpush1.xpose.msra.mxu0 0.0
        %635 = vmatprep.subr.mxu0 0.0
        %636 = vmatpush1.xpose.msra.mxu0 0.0
        %637 = vmatprep.subr.mxu0 0.0
        %638 = vmatpush1.xpose.msra.mxu0 0.0
        %639 = vmatprep.subr.mxu0 0.0
        %640 = vmatpush1.xpose.msra.mxu0 0.0
        %641 = vmatprep.subr.mxu0 0.0
        %642 = vmatpush1.xpose.msra.mxu0 0.0
        %643 = vmatprep.subr.mxu0 0.0
        %644 = vmatpush1.xpose.msra.mxu0 0.0
        %645 = vmatprep.subr.mxu0 0.0
        %646 = vmatpush1.xpose.msra.mxu0 0.0
        %647 = vmatprep.subr.mxu0 0.0
        %648 = vmatpush1.xpose.msra.mxu0 0.0
        %649 = vmatprep.mubr.f32.mxu0 0.0
        %v650 = vand.u32 %v325, 4294901760
        %651 = vmatmul.mubr.f32.gmra.mrb[0].mxu0 %v650
        %v652 = vpop.f32.mrb[0].mxu0
        %v653 = vadd.f32 %v472, %v652
        %v654 = vpop.f32.mrb[0].mxu0
        %655 = vmatprep.mubr.f32.mxu0 0.0
        %v656 = vand.u32 %v328, 4294901760
        %657 = vmatmul.mubr.f32.gmra.mrb[0].mxu0 %v656
        %v658 = vpop.f32.mrb[0].mxu0
        %v659 = vadd.f32 %v482, %v658
        %v660 = vpop.f32.mrb[0].mxu0
        %661 = vmatprep.mubr.f32.mxu0 0.0
        %v662 = vand.u32 %v331, 4294901760
        %663 = vmatmul.mubr.f32.gmra.mrb[0].mxu0 %v662
        %v664 = vpop.f32.mrb[0].mxu0
        %v665 = vadd.f32 %v492, %v664
        %v666 = vpop.f32.mrb[0].mxu0
        %667 = vmatprep.mubr.f32.mxu0 0.0
        %v668 = vand.u32 %v334, 4294901760
        %669 = vmatmul.mubr.f32.gmra.mrb[0].mxu0 %v668
        %v670 = vpop.f32.mrb[0].mxu0
        %v671 = vadd.f32 %v502, %v670
        %v672 = vpop.f32.mrb[0].mxu0
        %673 = vdwg.mxu0
        %674 = vmatprep.subr.mxu0 0.0
        %v675 = vand.u32 %v337, 4294901760
        %v676 = vsub.f32 %v337, %v675
        %677 = vmatpush1.xpose.msra.mxu0 %v676
        %678 = vmatprep.subr.mxu0 0.0
        %v679 = vand.u32 %v340, 4294901760
        %v680 = vsub.f32 %v340, %v679
        %681 = vmatpush1.xpose.msra.mxu0 %v680
        %682 = vmatprep.subr.mxu0 0.0
        %v683 = vand.u32 %v343, 4294901760
        %v684 = vsub.f32 %v343, %v683
        %685 = vmatpush1.xpose.msra.mxu0 %v684
        %686 = vmatprep.subr.mxu0 0.0
        %v687 = vand.u32 %v346, 4294901760
        %v688 = vsub.f32 %v346, %v687
        %689 = vmatpush1.xpose.msra.mxu0 %v688
        %690 = vmatprep.subr.mxu0 0.0
        %v691 = vand.u32 %v349, 4294901760
        %v692 = vsub.f32 %v349, %v691
        %693 = vmatpush1.xpose.msra.mxu0 %v692
        %694 = vmatprep.subr.mxu0 0.0
        %v695 = vand.u32 %v352, 4294901760
        %v696 = vsub.f32 %v352, %v695
        %697 = vmatpush1.xpose.msra.mxu0 %v696
        %698 = vmatprep.subr.mxu0 0.0
        %v699 = vand.u32 %v355, 4294901760
        %v700 = vsub.f32 %v355, %v699
        %701 = vmatpush1.xpose.msra.mxu0 %v700
        %702 = vmatprep.subr.mxu0 0.0
        %v703 = vand.u32 %v358, 4294901760
        %v704 = vsub.f32 %v358, %v703
        %705 = vmatpush1.xpose.msra.mxu0 %v704
        %706 = vmatprep.subr.mxu0 0.0
        %v707 = vand.u32 %v361, 4294901760
        %v708 = vsub.f32 %v361, %v707
        %709 = vmatpush1.xpose.msra.mxu0 %v708
        %710 = vmatprep.subr.mxu0 0.0
        %v711 = vand.u32 %v364, 4294901760
        %v712 = vsub.f32 %v364, %v711
        %713 = vmatpush1.xpose.msra.mxu0 %v712
        %714 = vmatprep.subr.mxu0 0.0
        %v715 = vand.u32 %v367, 4294901760
        %v716 = vsub.f32 %v367, %v715
        %717 = vmatpush1.xpose.msra.mxu0 %v716
        %718 = vmatprep.subr.mxu0 0.0
        %v719 = vand.u32 %v370, 4294901760
        %v720 = vsub.f32 %v370, %v719
        %721 = vmatpush1.xpose.msra.mxu0 %v720
        %722 = vmatprep.subr.mxu0 0.0
        %v723 = vand.u32 %v373, 4294901760
        %v724 = vsub.f32 %v373, %v723
        %725 = vmatpush1.xpose.msra.mxu0 %v724
        %726 = vmatprep.subr.mxu0 0.0
        %v727 = vand.u32 %v376, 4294901760
        %v728 = vsub.f32 %v376, %v727
        %729 = vmatpush1.xpose.msra.mxu0 %v728
        %730 = vmatprep.subr.mxu0 0.0
        %v731 = vand.u32 %v379, 4294901760
        %v732 = vsub.f32 %v379, %v731
        %733 = vmatpush1.xpose.msra.mxu0 %v732
        %734 = vmatprep.subr.mxu0 0.0
        %v735 = vand.u32 %v382, 4294901760
        %v736 = vsub.f32 %v382, %v735
        %737 = vmatpush1.xpose.msra.mxu0 %v736
        %738 = vmatprep.subr.mxu0 0.0
        %739 = vmatpush1.xpose.msra.mxu0 0.0
        %740 = vmatprep.subr.mxu0 0.0
        %741 = vmatpush1.xpose.msra.mxu0 0.0
        %742 = vmatprep.subr.mxu0 0.0
        %743 = vmatpush1.xpose.msra.mxu0 0.0
        %744 = vmatprep.subr.mxu0 0.0
        %745 = vmatpush1.xpose.msra.mxu0 0.0
        %746 = vmatprep.subr.mxu0 0.0
        %747 = vmatpush1.xpose.msra.mxu0 0.0
        %748 = vmatprep.subr.mxu0 0.0
        %749 = vmatpush1.xpose.msra.mxu0 0.0
        %750 = vmatprep.subr.mxu0 0.0
        %751 = vmatpush1.xpose.msra.mxu0 0.0
        %752 = vmatprep.subr.mxu0 0.0
        %753 = vmatpush1.xpose.msra.mxu0 0.0
        %754 = vmatprep.subr.mxu0 0.0
        %755 = vmatpush1.xpose.msra.mxu0 0.0
        %756 = vmatprep.subr.mxu0 0.0
        %757 = vmatpush1.xpose.msra.mxu0 0.0
        %758 = vmatprep.subr.mxu0 0.0
        %759 = vmatpush1.xpose.msra.mxu0 0.0
        %760 = vmatprep.subr.mxu0 0.0
        %761 = vmatpush1.xpose.msra.mxu0 0.0
        %762 = vmatprep.subr.mxu0 0.0
        %763 = vmatpush1.xpose.msra.mxu0 0.0
        %764 = vmatprep.subr.mxu0 0.0
        %765 = vmatpush1.xpose.msra.mxu0 0.0
        %766 = vmatprep.subr.mxu0 0.0
        %767 = vmatpush1.xpose.msra.mxu0 0.0
        %768 = vmatprep.subr.mxu0 0.0
        %769 = vmatpush1.xpose.msra.mxu0 0.0
        %770 = vmatprep.mubr.f32.mxu0 0.0
        %v771 = vand.u32 %v325, 4294901760
        %v772 = vsub.f32 %v325, %v771
        %773 = vmatmul.mubr.f32.gmra.mrb[0].mxu0 %v772
        %v774 = vpop.f32.mrb[0].mxu0
        %v775 = vadd.f32 %v653, %v774
        %v776 = vpop.f32.mrb[0].mxu0
        %777 = vmatprep.mubr.f32.mxu0 0.0
        %v778 = vand.u32 %v328, 4294901760
        %v779 = vsub.f32 %v328, %v778
        %780 = vmatmul.mubr.f32.gmra.mrb[0].mxu0 %v779
        %v781 = vpop.f32.mrb[0].mxu0
        %v782 = vadd.f32 %v659, %v781
        %v783 = vpop.f32.mrb[0].mxu0
        %784 = vmatprep.mubr.f32.mxu0 0.0
        %v785 = vand.u32 %v331, 4294901760
        %v786 = vsub.f32 %v331, %v785
        %787 = vmatmul.mubr.f32.gmra.mrb[0].mxu0 %v786
        %v788 = vpop.f32.mrb[0].mxu0
        %v789 = vadd.f32 %v665, %v788
        %v790 = vpop.f32.mrb[0].mxu0
        %791 = vmatprep.mubr.f32.mxu0 0.0
        %v792 = vand.u32 %v334, 4294901760
        %v793 = vsub.f32 %v334, %v792
        %794 = vmatmul.mubr.f32.gmra.mrb[0].mxu0 %v793
        %v795 = vpop.f32.mrb[0].mxu0
        %v796 = vadd.f32 %v671, %v795
        %v797 = vpop.f32.mrb[0].mxu0
        %798 = vdwg.mxu0
        %799 = vmatprep.subr.mxu0 0.0
        %v800 = vand.u32 %v337, 4294901760
        %801 = vmatpush1.xpose.msra.mxu0 %v800
        %802 = vmatprep.subr.mxu0 0.0
        %v803 = vand.u32 %v340, 4294901760
        %804 = vmatpush1.xpose.msra.mxu0 %v803
        %805 = vmatprep.subr.mxu0 0.0
        %v806 = vand.u32 %v343, 4294901760
        %807 = vmatpush1.xpose.msra.mxu0 %v806
        %808 = vmatprep.subr.mxu0 0.0
        %v809 = vand.u32 %v346, 4294901760
        %810 = vmatpush1.xpose.msra.mxu0 %v809
        %811 = vmatprep.subr.mxu0 0.0
        %v812 = vand.u32 %v349, 4294901760
        %813 = vmatpush1.xpose.msra.mxu0 %v812
        %814 = vmatprep.subr.mxu0 0.0
        %v815 = vand.u32 %v352, 4294901760
        %816 = vmatpush1.xpose.msra.mxu0 %v815
        %817 = vmatprep.subr.mxu0 0.0
        %v818 = vand.u32 %v355, 4294901760
        %819 = vmatpush1.xpose.msra.mxu0 %v818
        %820 = vmatprep.subr.mxu0 0.0
        %v821 = vand.u32 %v358, 4294901760
        %822 = vmatpush1.xpose.msra.mxu0 %v821
        %823 = vmatprep.subr.mxu0 0.0
        %v824 = vand.u32 %v361, 4294901760
        %825 = vmatpush1.xpose.msra.mxu0 %v824
        %826 = vmatprep.subr.mxu0 0.0
        %v827 = vand.u32 %v364, 4294901760
        %828 = vmatpush1.xpose.msra.mxu0 %v827
        %829 = vmatprep.subr.mxu0 0.0
        %v830 = vand.u32 %v367, 4294901760
        %831 = vmatpush1.xpose.msra.mxu0 %v830
        %832 = vmatprep.subr.mxu0 0.0
        %v833 = vand.u32 %v370, 4294901760
        %834 = vmatpush1.xpose.msra.mxu0 %v833
        %835 = vmatprep.subr.mxu0 0.0
        %v836 = vand.u32 %v373, 4294901760
        %837 = vmatpush1.xpose.msra.mxu0 %v836
        %838 = vmatprep.subr.mxu0 0.0
        %v839 = vand.u32 %v376, 4294901760
        %840 = vmatpush1.xpose.msra.mxu0 %v839
        %841 = vmatprep.subr.mxu0 0.0
        %v842 = vand.u32 %v379, 4294901760
        %843 = vmatpush1.xpose.msra.mxu0 %v842
        %844 = vmatprep.subr.mxu0 0.0
        %v845 = vand.u32 %v382, 4294901760
        %846 = vmatpush1.xpose.msra.mxu0 %v845
        %847 = vmatprep.subr.mxu0 0.0
        %848 = vmatpush1.xpose.msra.mxu0 0.0
        %849 = vmatprep.subr.mxu0 0.0
        %850 = vmatpush1.xpose.msra.mxu0 0.0
        %851 = vmatprep.subr.mxu0 0.0
        %852 = vmatpush1.xpose.msra.mxu0 0.0
        %853 = vmatprep.subr.mxu0 0.0
        %854 = vmatpush1.xpose.msra.mxu0 0.0
        %855 = vmatprep.subr.mxu0 0.0
        %856 = vmatpush1.xpose.msra.mxu0 0.0
        %857 = vmatprep.subr.mxu0 0.0
        %858 = vmatpush1.xpose.msra.mxu0 0.0
        %859 = vmatprep.subr.mxu0 0.0
        %860 = vmatpush1.xpose.msra.mxu0 0.0
        %861 = vmatprep.subr.mxu0 0.0
        %862 = vmatpush1.xpose.msra.mxu0 0.0
        %863 = vmatprep.subr.mxu0 0.0
        %864 = vmatpush1.xpose.msra.mxu0 0.0
        %865 = vmatprep.subr.mxu0 0.0
        %866 = vmatpush1.xpose.msra.mxu0 0.0
        %867 = vmatprep.subr.mxu0 0.0
        %868 = vmatpush1.xpose.msra.mxu0 0.0
        %869 = vmatprep.subr.mxu0 0.0
        %870 = vmatpush1.xpose.msra.mxu0 0.0
        %871 = vmatprep.subr.mxu0 0.0
        %872 = vmatpush1.xpose.msra.mxu0 0.0
        %873 = vmatprep.subr.mxu0 0.0
        %874 = vmatpush1.xpose.msra.mxu0 0.0
        %875 = vmatprep.subr.mxu0 0.0
        %876 = vmatpush1.xpose.msra.mxu0 0.0
        %877 = vmatprep.subr.mxu0 0.0
        %878 = vmatpush1.xpose.msra.mxu0 0.0
        %879 = vmatprep.mubr.f32.mxu0 0.0
        %v880 = vand.u32 %v325, 4294901760
        %v881 = vsub.f32 %v325, %v880
        %v882 = vand.u32 %v881, 4294901760
        %883 = vmatmul.mubr.f32.gmra.mrb[0].mxu0 %v882
        %v884 = vpop.f32.mrb[0].mxu0
        %v885 = vadd.f32 %v775, %v884
        %v886 = vpop.f32.mrb[0].mxu0
        %887 = vmatprep.mubr.f32.mxu0 0.0
        %v888 = vand.u32 %v328, 4294901760
        %v889 = vsub.f32 %v328, %v888
        %v890 = vand.u32 %v889, 4294901760
        %891 = vmatmul.mubr.f32.gmra.mrb[0].mxu0 %v890
        %v892 = vpop.f32.mrb[0].mxu0
        %v893 = vadd.f32 %v782, %v892
        %v894 = vpop.f32.mrb[0].mxu0
        %895 = vmatprep.mubr.f32.mxu0 0.0
        %v896 = vand.u32 %v331, 4294901760
        %v897 = vsub.f32 %v331, %v896
        %v898 = vand.u32 %v897, 4294901760
        %899 = vmatmul.mubr.f32.gmra.mrb[0].mxu0 %v898
        %v900 = vpop.f32.mrb[0].mxu0
        %v901 = vadd.f32 %v789, %v900
        %v902 = vpop.f32.mrb[0].mxu0
        %903 = vmatprep.mubr.f32.mxu0 0.0
        %v904 = vand.u32 %v334, 4294901760
        %v905 = vsub.f32 %v334, %v904
        %v906 = vand.u32 %v905, 4294901760
        %907 = vmatmul.mubr.f32.gmra.mrb[0].mxu0 %v906
        %v908 = vpop.f32.mrb[0].mxu0
        %v909 = vadd.f32 %v796, %v908
        %v910 = vpop.f32.mrb[0].mxu0
        %911 = vdwg.mxu0
        %912 = vmatprep.subr.mxu0 0.0
        %v913 = vand.u32 %v337, 4294901760
        %v914 = vsub.f32 %v337, %v913
        %v915 = vand.u32 %v914, 4294901760
        %916 = vmatpush1.xpose.msra.mxu0 %v915
        %917 = vmatprep.subr.mxu0 0.0
        %v918 = vand.u32 %v340, 4294901760
        %v919 = vsub.f32 %v340, %v918
        %v920 = vand.u32 %v919, 4294901760
        %921 = vmatpush1.xpose.msra.mxu0 %v920
        %922 = vmatprep.subr.mxu0 0.0
        %v923 = vand.u32 %v343, 4294901760
        %v924 = vsub.f32 %v343, %v923
        %v925 = vand.u32 %v924, 4294901760
        %926 = vmatpush1.xpose.msra.mxu0 %v925
        %927 = vmatprep.subr.mxu0 0.0
        %v928 = vand.u32 %v346, 4294901760
        %v929 = vsub.f32 %v346, %v928
        %v930 = vand.u32 %v929, 4294901760
        %931 = vmatpush1.xpose.msra.mxu0 %v930
        %932 = vmatprep.subr.mxu0 0.0
        %v933 = vand.u32 %v349, 4294901760
        %v934 = vsub.f32 %v349, %v933
        %v935 = vand.u32 %v934, 4294901760
        %936 = vmatpush1.xpose.msra.mxu0 %v935
        %937 = vmatprep.subr.mxu0 0.0
        %v938 = vand.u32 %v352, 4294901760
        %v939 = vsub.f32 %v352, %v938
        %v940 = vand.u32 %v939, 4294901760
        %941 = vmatpush1.xpose.msra.mxu0 %v940
        %942 = vmatprep.subr.mxu0 0.0
        %v943 = vand.u32 %v355, 4294901760
        %v944 = vsub.f32 %v355, %v943
        %v945 = vand.u32 %v944, 4294901760
        %946 = vmatpush1.xpose.msra.mxu0 %v945
        %947 = vmatprep.subr.mxu0 0.0
        %v948 = vand.u32 %v358, 4294901760
        %v949 = vsub.f32 %v358, %v948
        %v950 = vand.u32 %v949, 4294901760
        %951 = vmatpush1.xpose.msra.mxu0 %v950
        %952 = vmatprep.subr.mxu0 0.0
        %v953 = vand.u32 %v361, 4294901760
        %v954 = vsub.f32 %v361, %v953
        %v955 = vand.u32 %v954, 4294901760
        %956 = vmatpush1.xpose.msra.mxu0 %v955
        %957 = vmatprep.subr.mxu0 0.0
        %v958 = vand.u32 %v364, 4294901760
        %v959 = vsub.f32 %v364, %v958
        %v960 = vand.u32 %v959, 4294901760
        %961 = vmatpush1.xpose.msra.mxu0 %v960
        %962 = vmatprep.subr.mxu0 0.0
        %v963 = vand.u32 %v367, 4294901760
        %v964 = vsub.f32 %v367, %v963
        %v965 = vand.u32 %v964, 4294901760
        %966 = vmatpush1.xpose.msra.mxu0 %v965
        %967 = vmatprep.subr.mxu0 0.0
        %v968 = vand.u32 %v370, 4294901760
        %v969 = vsub.f32 %v370, %v968
        %v970 = vand.u32 %v969, 4294901760
        %971 = vmatpush1.xpose.msra.mxu0 %v970
        %972 = vmatprep.subr.mxu0 0.0
        %v973 = vand.u32 %v373, 4294901760
        %v974 = vsub.f32 %v373, %v973
        %v975 = vand.u32 %v974, 4294901760
        %976 = vmatpush1.xpose.msra.mxu0 %v975
        %977 = vmatprep.subr.mxu0 0.0
        %v978 = vand.u32 %v376, 4294901760
        %v979 = vsub.f32 %v376, %v978
        %v980 = vand.u32 %v979, 4294901760
        %981 = vmatpush1.xpose.msra.mxu0 %v980
        %982 = vmatprep.subr.mxu0 0.0
        %v983 = vand.u32 %v379, 4294901760
        %v984 = vsub.f32 %v379, %v983
        %v985 = vand.u32 %v984, 4294901760
        %986 = vmatpush1.xpose.msra.mxu0 %v985
        %987 = vmatprep.subr.mxu0 0.0
        %v988 = vand.u32 %v382, 4294901760
        %v989 = vsub.f32 %v382, %v988
        %v990 = vand.u32 %v989, 4294901760
        %991 = vmatpush1.xpose.msra.mxu0 %v990
        %992 = vmatprep.subr.mxu0 0.0
        %993 = vmatpush1.xpose.msra.mxu0 0.0
        %994 = vmatprep.subr.mxu0 0.0
        %995 = vmatpush1.xpose.msra.mxu0 0.0
        %996 = vmatprep.subr.mxu0 0.0
        %997 = vmatpush1.xpose.msra.mxu0 0.0
        %998 = vmatprep.subr.mxu0 0.0
        %999 = vmatpush1.xpose.msra.mxu0 0.0
        %1000 = vmatprep.subr.mxu0 0.0
        %1001 = vmatpush1.xpose.msra.mxu0 0.0
        %1002 = vmatprep.subr.mxu0 0.0
        %1003 = vmatpush1.xpose.msra.mxu0 0.0
        %1004 = vmatprep.subr.mxu0 0.0
        %1005 = vmatpush1.xpose.msra.mxu0 0.0
        %1006 = vmatprep.subr.mxu0 0.0
        %1007 = vmatpush1.xpose.msra.mxu0 0.0
        %1008 = vmatprep.subr.mxu0 0.0
        %1009 = vmatpush1.xpose.msra.mxu0 0.0
        %1010 = vmatprep.subr.mxu0 0.0
        %1011 = vmatpush1.xpose.msra.mxu0 0.0
        %1012 = vmatprep.subr.mxu0 0.0
        %1013 = vmatpush1.xpose.msra.mxu0 0.0
        %1014 = vmatprep.subr.mxu0 0.0
        %1015 = vmatpush1.xpose.msra.mxu0 0.0
        %1016 = vmatprep.subr.mxu0 0.0
        %1017 = vmatpush1.xpose.msra.mxu0 0.0
        %1018 = vmatprep.subr.mxu0 0.0
        %1019 = vmatpush1.xpose.msra.mxu0 0.0
        %1020 = vmatprep.subr.mxu0 0.0
        %1021 = vmatpush1.xpose.msra.mxu0 0.0
        %1022 = vmatprep.subr.mxu0 0.0
        %1023 = vmatpush1.xpose.msra.mxu0 0.0
        %1024 = vmatprep.mubr.f32.mxu0 0.0
        %v1025 = vand.u32 %v325, 4294901760
        %1026 = vmatmul.mubr.f32.gmra.mrb[0].mxu0 %v1025
        %v1027 = vpop.f32.mrb[0].mxu0
        %v1028 = vadd.f32 %v885, %v1027
        %v1029 = vpop.f32.mrb[0].mxu0
        %1030 = vmatprep.mubr.f32.mxu0 0.0
        %v1031 = vand.u32 %v328, 4294901760
        %1032 = vmatmul.mubr.f32.gmra.mrb[0].mxu0 %v1031
        %v1033 = vpop.f32.mrb[0].mxu0
        %v1034 = vadd.f32 %v893, %v1033
        %v1035 = vpop.f32.mrb[0].mxu0
        %1036 = vmatprep.mubr.f32.mxu0 0.0
        %v1037 = vand.u32 %v331, 4294901760
        %1038 = vmatmul.mubr.f32.gmra.mrb[0].mxu0 %v1037
        %v1039 = vpop.f32.mrb[0].mxu0
        %v1040 = vadd.f32 %v901, %v1039
        %v1041 = vpop.f32.mrb[0].mxu0
        %1042 = vmatprep.mubr.f32.mxu0 0.0
        %v1043 = vand.u32 %v334, 4294901760
        %1044 = vmatmul.mubr.f32.gmra.mrb[0].mxu0 %v1043
        %v1045 = vpop.f32.mrb[0].mxu0
        %v1046 = vadd.f32 %v909, %v1045
        %v1047 = vpop.f32.mrb[0].mxu0
        %1048 = vdwg.mxu0
        %1049 = vmatprep.subr.mxu0 0.0
        %v1050 = vand.u32 %v337, 4294901760
        %1051 = vmatpush1.xpose.msra.mxu0 %v1050
        %1052 = vmatprep.subr.mxu0 0.0
        %v1053 = vand.u32 %v340, 4294901760
        %1054 = vmatpush1.xpose.msra.mxu0 %v1053
        %1055 = vmatprep.subr.mxu0 0.0
        %v1056 = vand.u32 %v343, 4294901760
        %1057 = vmatpush1.xpose.msra.mxu0 %v1056
        %1058 = vmatprep.subr.mxu0 0.0
        %v1059 = vand.u32 %v346, 4294901760
        %1060 = vmatpush1.xpose.msra.mxu0 %v1059
        %1061 = vmatprep.subr.mxu0 0.0
        %v1062 = vand.u32 %v349, 4294901760
        %1063 = vmatpush1.xpose.msra.mxu0 %v1062
        %1064 = vmatprep.subr.mxu0 0.0
        %v1065 = vand.u32 %v352, 4294901760
        %1066 = vmatpush1.xpose.msra.mxu0 %v1065
        %1067 = vmatprep.subr.mxu0 0.0
        %v1068 = vand.u32 %v355, 4294901760
        %1069 = vmatpush1.xpose.msra.mxu0 %v1068
        %1070 = vmatprep.subr.mxu0 0.0
        %v1071 = vand.u32 %v358, 4294901760
        %1072 = vmatpush1.xpose.msra.mxu0 %v1071
        %1073 = vmatprep.subr.mxu0 0.0
        %v1074 = vand.u32 %v361, 4294901760
        %1075 = vmatpush1.xpose.msra.mxu0 %v1074
        %1076 = vmatprep.subr.mxu0 0.0
        %v1077 = vand.u32 %v364, 4294901760
        %1078 = vmatpush1.xpose.msra.mxu0 %v1077
        %1079 = vmatprep.subr.mxu0 0.0
        %v1080 = vand.u32 %v367, 4294901760
        %1081 = vmatpush1.xpose.msra.mxu0 %v1080
        %1082 = vmatprep.subr.mxu0 0.0
        %v1083 = vand.u32 %v370, 4294901760
        %1084 = vmatpush1.xpose.msra.mxu0 %v1083
        %1085 = vmatprep.subr.mxu0 0.0
        %v1086 = vand.u32 %v373, 4294901760
        %1087 = vmatpush1.xpose.msra.mxu0 %v1086
        %1088 = vmatprep.subr.mxu0 0.0
        %v1089 = vand.u32 %v376, 4294901760
        %1090 = vmatpush1.xpose.msra.mxu0 %v1089
        %1091 = vmatprep.subr.mxu0 0.0
        %v1092 = vand.u32 %v379, 4294901760
        %1093 = vmatpush1.xpose.msra.mxu0 %v1092
        %1094 = vmatprep.subr.mxu0 0.0
        %v1095 = vand.u32 %v382, 4294901760
        %1096 = vmatpush1.xpose.msra.mxu0 %v1095
        %1097 = vmatprep.subr.mxu0 0.0
        %1098 = vmatpush1.xpose.msra.mxu0 0.0
        %1099 = vmatprep.subr.mxu0 0.0
        %1100 = vmatpush1.xpose.msra.mxu0 0.0
        %1101 = vmatprep.subr.mxu0 0.0
        %1102 = vmatpush1.xpose.msra.mxu0 0.0
        %1103 = vmatprep.subr.mxu0 0.0
        %1104 = vmatpush1.xpose.msra.mxu0 0.0
        %1105 = vmatprep.subr.mxu0 0.0
        %1106 = vmatpush1.xpose.msra.mxu0 0.0
        %1107 = vmatprep.subr.mxu0 0.0
        %1108 = vmatpush1.xpose.msra.mxu0 0.0
        %1109 = vmatprep.subr.mxu0 0.0
        %1110 = vmatpush1.xpose.msra.mxu0 0.0
        %1111 = vmatprep.subr.mxu0 0.0
        %1112 = vmatpush1.xpose.msra.mxu0 0.0
        %1113 = vmatprep.subr.mxu0 0.0
        %1114 = vmatpush1.xpose.msra.mxu0 0.0
        %1115 = vmatprep.subr.mxu0 0.0
        %1116 = vmatpush1.xpose.msra.mxu0 0.0
        %1117 = vmatprep.subr.mxu0 0.0
        %1118 = vmatpush1.xpose.msra.mxu0 0.0
        %1119 = vmatprep.subr.mxu0 0.0
        %1120 = vmatpush1.xpose.msra.mxu0 0.0
        %1121 = vmatprep.subr.mxu0 0.0
        %1122 = vmatpush1.xpose.msra.mxu0 0.0
        %1123 = vmatprep.subr.mxu0 0.0
        %1124 = vmatpush1.xpose.msra.mxu0 0.0
        %1125 = vmatprep.subr.mxu0 0.0
        %1126 = vmatpush1.xpose.msra.mxu0 0.0
        %1127 = vmatprep.subr.mxu0 0.0
        %1128 = vmatpush1.xpose.msra.mxu0 0.0
        %1129 = vmatprep.mubr.f32.mxu0 0.0
        %v1130 = vand.u32 %v325, 4294901760
        %1131 = vmatmul.mubr.f32.gmra.mrb[0].mxu0 %v1130
        %v1132 = vpop.f32.mrb[0].mxu0
        %v1133 = vadd.f32 %v1028, %v1132
        %v1134 = vpop.f32.mrb[0].mxu0
        %1135 = vmatprep.mubr.f32.mxu0 0.0
        %v1136 = vand.u32 %v328, 4294901760
        %1137 = vmatmul.mubr.f32.gmra.mrb[0].mxu0 %v1136
        %v1138 = vpop.f32.mrb[0].mxu0
        %v1139 = vadd.f32 %v1034, %v1138
        %v1140 = vpop.f32.mrb[0].mxu0
        %1141 = vmatprep.mubr.f32.mxu0 0.0
        %v1142 = vand.u32 %v331, 4294901760
        %1143 = vmatmul.mubr.f32.gmra.mrb[0].mxu0 %v1142
        %v1144 = vpop.f32.mrb[0].mxu0
        %v1145 = vadd.f32 %v1040, %v1144
        %v1146 = vpop.f32.mrb[0].mxu0
        %1147 = vmatprep.mubr.f32.mxu0 0.0
        %v1148 = vand.u32 %v334, 4294901760
        %1149 = vmatmul.mubr.f32.gmra.mrb[0].mxu0 %v1148
        %v1150 = vpop.f32.mrb[0].mxu0
        %v1151 = vadd.f32 %v1046, %v1150
        %v1152 = vpop.f32.mrb[0].mxu0
        %1153 = vdwg.mxu0
        %v1154 = vmax.f32 %v1133, 0.0
        %v1155 = vmax.f32 %v1139, 0.0
        %v1156 = vmax.f32 %v1145, 0.0
        %v1157 = vmax.f32 %v1151, 0.0
        %v1158 = vld [vmem:[%s3] sm:$0xff]
        %v1159 = vld [vmem:[%s3 + $0x8] sm:$0xff]
        %v1160 = vld [vmem:[%s3 + $0x10] sm:$0xff]
        %v1161 = vld [vmem:[%s3 + $0x18] sm:$0xff]
        %v1162 = vld [vmem:[%s4] sm:$0xff]
        %v1163 = vld [vmem:[%s4 + $0x8] sm:$0xff]
        %v1164 = vld [vmem:[%s4 + $0x10] sm:$0xff]
        %v1165 = vld [vmem:[%s4 + $0x18] sm:$0xff]
        %1167 = vset.pattern.permute.xlu0 0
        %1168 = vperm.xlu0 %1167, %v1162
        %v1169 = vpop.permute.xlu0 %1168
        %1172 = vset.pattern.permute.xlu0 0
        %1173 = vperm.xlu0 %1172, %v1163
        %v1174 = vpop.permute.xlu0 %1173
        %1177 = vset.pattern.permute.xlu0 0
        %1178 = vperm.xlu0 %1177, %v1164
        %v1179 = vpop.permute.xlu0 %1178
        %1182 = vset.pattern.permute.xlu0 0
        %1183 = vperm.xlu0 %1182, %v1165
        %v1184 = vpop.permute.xlu0 %1183
        %vm1186 = vcmask 261120
        %v1188 = vsel %vm1186, %v1158, 0
        %v1191 = vsel %vm1186, %v1159, 0
        %v1194 = vsel %vm1186, %v1160, 0
        %v1197 = vsel %vm1186, %v1161, 0
        %1199 = vmatprep.subr.mxu0 0.0
        %v1200 = vand.u32 %v1154, 4294901760
        %1201 = vmatpush1.msra.mxu0 %v1200
        %1202 = vmatprep.subr.mxu0 0.0
        %v1203 = vand.u32 %v1155, 4294901760
        %1204 = vmatpush1.msra.mxu0 %v1203
        %1205 = vmatprep.subr.mxu0 0.0
        %v1206 = vand.u32 %v1156, 4294901760
        %1207 = vmatpush1.msra.mxu0 %v1206
        %1208 = vmatprep.subr.mxu0 0.0
        %v1209 = vand.u32 %v1157, 4294901760
        %1210 = vmatpush1.msra.mxu0 %v1209
        %1211 = vmatprep.subr.mxu0 0.0
        %1212 = vmatpush1.msra.mxu0 0.0
        %1213 = vmatprep.subr.mxu0 0.0
        %1214 = vmatpush1.msra.mxu0 0.0
        %1215 = vmatprep.subr.mxu0 0.0
        %1216 = vmatpush1.msra.mxu0 0.0
        %1217 = vmatprep.subr.mxu0 0.0
        %1218 = vmatpush1.msra.mxu0 0.0
        %1219 = vmatprep.subr.mxu0 0.0
        %1220 = vmatpush1.msra.mxu0 0.0
        %1221 = vmatprep.subr.mxu0 0.0
        %1222 = vmatpush1.msra.mxu0 0.0
        %1223 = vmatprep.subr.mxu0 0.0
        %1224 = vmatpush1.msra.mxu0 0.0
        %1225 = vmatprep.subr.mxu0 0.0
        %1226 = vmatpush1.msra.mxu0 0.0
        %1227 = vmatprep.subr.mxu0 0.0
        %1228 = vmatpush1.msra.mxu0 0.0
        %1229 = vmatprep.subr.mxu0 0.0
        %1230 = vmatpush1.msra.mxu0 0.0
        %1231 = vmatprep.subr.mxu0 0.0
        %1232 = vmatpush1.msra.mxu0 0.0
        %1233 = vmatprep.subr.mxu0 0.0
        %1234 = vmatpush1.msra.mxu0 0.0
        %1235 = vmatprep.subr.mxu0 0.0
        %1236 = vmatpush1.msra.mxu0 0.0
        %1237 = vmatprep.subr.mxu0 0.0
        %1238 = vmatpush1.msra.mxu0 0.0
        %1239 = vmatprep.subr.mxu0 0.0
        %1240 = vmatpush1.msra.mxu0 0.0
        %1241 = vmatprep.subr.mxu0 0.0
        %1242 = vmatpush1.msra.mxu0 0.0
        %1243 = vmatprep.subr.mxu0 0.0
        %1244 = vmatpush1.msra.mxu0 0.0
        %1245 = vmatprep.subr.mxu0 0.0
        %1246 = vmatpush1.msra.mxu0 0.0
        %1247 = vmatprep.subr.mxu0 0.0
        %1248 = vmatpush1.msra.mxu0 0.0
        %1249 = vmatprep.subr.mxu0 0.0
        %1250 = vmatpush1.msra.mxu0 0.0
        %1251 = vmatprep.subr.mxu0 0.0
        %1252 = vmatpush1.msra.mxu0 0.0
        %1253 = vmatprep.subr.mxu0 0.0
        %1254 = vmatpush1.msra.mxu0 0.0
        %1255 = vmatprep.subr.mxu0 0.0
        %1256 = vmatpush1.msra.mxu0 0.0
        %1257 = vmatprep.subr.mxu0 0.0
        %1258 = vmatpush1.msra.mxu0 0.0
        %1259 = vmatprep.subr.mxu0 0.0
        %1260 = vmatpush1.msra.mxu0 0.0
        %1261 = vmatprep.subr.mxu0 0.0
        %1262 = vmatpush1.msra.mxu0 0.0
        %1263 = vmatprep.subr.mxu0 0.0
        %1264 = vmatpush1.msra.mxu0 0.0
        %1265 = vmatprep.subr.mxu0 0.0
        %1266 = vmatpush1.msra.mxu0 0.0
        %1267 = vmatprep.mubr.f32.mxu0 0.0
        %v1268 = vand.u32 %v1188, 4294901760
        %v1269 = vsub.f32 %v1188, %v1268
        %v1270 = vand.u32 %v1269, 4294901760
        %v1271 = vsub.f32 %v1269, %v1270
        %v1272 = vand.u32 %v1271, 4294901760
        %1273 = vmatmul.mubr.f32.gmra.mrb[0].mxu0 %v1272
        %v1274 = vpop.f32.mrb[0].mxu0
        %v1275 = vadd.f32 %v1169, %v1274
        %v1276 = vpop.f32.mrb[0].mxu0
        %1277 = vmatprep.mubr.f32.mxu0 0.0
        %v1278 = vand.u32 %v1191, 4294901760
        %v1279 = vsub.f32 %v1191, %v1278
        %v1280 = vand.u32 %v1279, 4294901760
        %v1281 = vsub.f32 %v1279, %v1280
        %v1282 = vand.u32 %v1281, 4294901760
        %1283 = vmatmul.mubr.f32.gmra.mrb[0].mxu0 %v1282
        %v1284 = vpop.f32.mrb[0].mxu0
        %v1285 = vadd.f32 %v1174, %v1284
        %v1286 = vpop.f32.mrb[0].mxu0
        %1287 = vmatprep.mubr.f32.mxu0 0.0
        %v1288 = vand.u32 %v1194, 4294901760
        %v1289 = vsub.f32 %v1194, %v1288
        %v1290 = vand.u32 %v1289, 4294901760
        %v1291 = vsub.f32 %v1289, %v1290
        %v1292 = vand.u32 %v1291, 4294901760
        %1293 = vmatmul.mubr.f32.gmra.mrb[0].mxu0 %v1292
        %v1294 = vpop.f32.mrb[0].mxu0
        %v1295 = vadd.f32 %v1179, %v1294
        %v1296 = vpop.f32.mrb[0].mxu0
        %1297 = vmatprep.mubr.f32.mxu0 0.0
        %v1298 = vand.u32 %v1197, 4294901760
        %v1299 = vsub.f32 %v1197, %v1298
        %v1300 = vand.u32 %v1299, 4294901760
        %v1301 = vsub.f32 %v1299, %v1300
        %v1302 = vand.u32 %v1301, 4294901760
        %1303 = vmatmul.mubr.f32.gmra.mrb[0].mxu0 %v1302
        %v1304 = vpop.f32.mrb[0].mxu0
        %v1305 = vadd.f32 %v1184, %v1304
        %v1306 = vpop.f32.mrb[0].mxu0
        %1307 = vdwg.mxu0
        %1308 = vmatprep.subr.mxu0 0.0
        %v1309 = vand.u32 %v1154, 4294901760
        %v1310 = vsub.f32 %v1154, %v1309
        %v1311 = vand.u32 %v1310, 4294901760
        %v1312 = vsub.f32 %v1310, %v1311
        %v1313 = vand.u32 %v1312, 4294901760
        %1314 = vmatpush1.msra.mxu0 %v1313
        %1315 = vmatprep.subr.mxu0 0.0
        %v1316 = vand.u32 %v1155, 4294901760
        %v1317 = vsub.f32 %v1155, %v1316
        %v1318 = vand.u32 %v1317, 4294901760
        %v1319 = vsub.f32 %v1317, %v1318
        %v1320 = vand.u32 %v1319, 4294901760
        %1321 = vmatpush1.msra.mxu0 %v1320
        %1322 = vmatprep.subr.mxu0 0.0
        %v1323 = vand.u32 %v1156, 4294901760
        %v1324 = vsub.f32 %v1156, %v1323
        %v1325 = vand.u32 %v1324, 4294901760
        %v1326 = vsub.f32 %v1324, %v1325
        %v1327 = vand.u32 %v1326, 4294901760
        %1328 = vmatpush1.msra.mxu0 %v1327
        %1329 = vmatprep.subr.mxu0 0.0
        %v1330 = vand.u32 %v1157, 4294901760
        %v1331 = vsub.f32 %v1157, %v1330
        %v1332 = vand.u32 %v1331, 4294901760
        %v1333 = vsub.f32 %v1331, %v1332
        %v1334 = vand.u32 %v1333, 4294901760
        %1335 = vmatpush1.msra.mxu0 %v1334
        %1336 = vmatprep.subr.mxu0 0.0
        %1337 = vmatpush1.msra.mxu0 0.0
        %1338 = vmatprep.subr.mxu0 0.0
        %1339 = vmatpush1.msra.mxu0 0.0
        %1340 = vmatprep.subr.mxu0 0.0
        %1341 = vmatpush1.msra.mxu0 0.0
        %1342 = vmatprep.subr.mxu0 0.0
        %1343 = vmatpush1.msra.mxu0 0.0
        %1344 = vmatprep.subr.mxu0 0.0
        %1345 = vmatpush1.msra.mxu0 0.0
        %1346 = vmatprep.subr.mxu0 0.0
        %1347 = vmatpush1.msra.mxu0 0.0
        %1348 = vmatprep.subr.mxu0 0.0
        %1349 = vmatpush1.msra.mxu0 0.0
        %1350 = vmatprep.subr.mxu0 0.0
        %1351 = vmatpush1.msra.mxu0 0.0
        %1352 = vmatprep.subr.mxu0 0.0
        %1353 = vmatpush1.msra.mxu0 0.0
        %1354 = vmatprep.subr.mxu0 0.0
        %1355 = vmatpush1.msra.mxu0 0.0
        %1356 = vmatprep.subr.mxu0 0.0
        %1357 = vmatpush1.msra.mxu0 0.0
        %1358 = vmatprep.subr.mxu0 0.0
        %1359 = vmatpush1.msra.mxu0 0.0
        %1360 = vmatprep.subr.mxu0 0.0
        %1361 = vmatpush1.msra.mxu0 0.0
        %1362 = vmatprep.subr.mxu0 0.0
        %1363 = vmatpush1.msra.mxu0 0.0
        %1364 = vmatprep.subr.mxu0 0.0
        %1365 = vmatpush1.msra.mxu0 0.0
        %1366 = vmatprep.subr.mxu0 0.0
        %1367 = vmatpush1.msra.mxu0 0.0
        %1368 = vmatprep.subr.mxu0 0.0
        %1369 = vmatpush1.msra.mxu0 0.0
        %1370 = vmatprep.subr.mxu0 0.0
        %1371 = vmatpush1.msra.mxu0 0.0
        %1372 = vmatprep.subr.mxu0 0.0
        %1373 = vmatpush1.msra.mxu0 0.0
        %1374 = vmatprep.subr.mxu0 0.0
        %1375 = vmatpush1.msra.mxu0 0.0
        %1376 = vmatprep.subr.mxu0 0.0
        %1377 = vmatpush1.msra.mxu0 0.0
        %1378 = vmatprep.subr.mxu0 0.0
        %1379 = vmatpush1.msra.mxu0 0.0
        %1380 = vmatprep.subr.mxu0 0.0
        %1381 = vmatpush1.msra.mxu0 0.0
        %1382 = vmatprep.subr.mxu0 0.0
        %1383 = vmatpush1.msra.mxu0 0.0
        %1384 = vmatprep.subr.mxu0 0.0
        %1385 = vmatpush1.msra.mxu0 0.0
        %1386 = vmatprep.subr.mxu0 0.0
        %1387 = vmatpush1.msra.mxu0 0.0
        %1388 = vmatprep.subr.mxu0 0.0
        %1389 = vmatpush1.msra.mxu0 0.0
        %1390 = vmatprep.subr.mxu0 0.0
        %1391 = vmatpush1.msra.mxu0 0.0
        %1392 = vmatprep.mubr.f32.mxu0 0.0
        %v1393 = vand.u32 %v1188, 4294901760
        %1394 = vmatmul.mubr.f32.gmra.mrb[0].mxu0 %v1393
        %v1395 = vpop.f32.mrb[0].mxu0
        %v1396 = vadd.f32 %v1275, %v1395
        %v1397 = vpop.f32.mrb[0].mxu0
        %1398 = vmatprep.mubr.f32.mxu0 0.0
        %v1399 = vand.u32 %v1191, 4294901760
        %1400 = vmatmul.mubr.f32.gmra.mrb[0].mxu0 %v1399
        %v1401 = vpop.f32.mrb[0].mxu0
        %v1402 = vadd.f32 %v1285, %v1401
        %v1403 = vpop.f32.mrb[0].mxu0
        %1404 = vmatprep.mubr.f32.mxu0 0.0
        %v1405 = vand.u32 %v1194, 4294901760
        %1406 = vmatmul.mubr.f32.gmra.mrb[0].mxu0 %v1405
        %v1407 = vpop.f32.mrb[0].mxu0
        %v1408 = vadd.f32 %v1295, %v1407
        %v1409 = vpop.f32.mrb[0].mxu0
        %1410 = vmatprep.mubr.f32.mxu0 0.0
        %v1411 = vand.u32 %v1197, 4294901760
        %1412 = vmatmul.mubr.f32.gmra.mrb[0].mxu0 %v1411
        %v1413 = vpop.f32.mrb[0].mxu0
        %v1414 = vadd.f32 %v1305, %v1413
        %v1415 = vpop.f32.mrb[0].mxu0
        %1416 = vdwg.mxu0
        %1417 = vmatprep.subr.mxu0 0.0
        %v1418 = vand.u32 %v1154, 4294901760
        %v1419 = vsub.f32 %v1154, %v1418
        %1420 = vmatpush1.msra.mxu0 %v1419
        %1421 = vmatprep.subr.mxu0 0.0
        %v1422 = vand.u32 %v1155, 4294901760
        %v1423 = vsub.f32 %v1155, %v1422
        %1424 = vmatpush1.msra.mxu0 %v1423
        %1425 = vmatprep.subr.mxu0 0.0
        %v1426 = vand.u32 %v1156, 4294901760
        %v1427 = vsub.f32 %v1156, %v1426
        %1428 = vmatpush1.msra.mxu0 %v1427
        %1429 = vmatprep.subr.mxu0 0.0
        %v1430 = vand.u32 %v1157, 4294901760
        %v1431 = vsub.f32 %v1157, %v1430
        %1432 = vmatpush1.msra.mxu0 %v1431
        %1433 = vmatprep.subr.mxu0 0.0
        %1434 = vmatpush1.msra.mxu0 0.0
        %1435 = vmatprep.subr.mxu0 0.0
        %1436 = vmatpush1.msra.mxu0 0.0
        %1437 = vmatprep.subr.mxu0 0.0
        %1438 = vmatpush1.msra.mxu0 0.0
        %1439 = vmatprep.subr.mxu0 0.0
        %1440 = vmatpush1.msra.mxu0 0.0
        %1441 = vmatprep.subr.mxu0 0.0
        %1442 = vmatpush1.msra.mxu0 0.0
        %1443 = vmatprep.subr.mxu0 0.0
        %1444 = vmatpush1.msra.mxu0 0.0
        %1445 = vmatprep.subr.mxu0 0.0
        %1446 = vmatpush1.msra.mxu0 0.0
        %1447 = vmatprep.subr.mxu0 0.0
        %1448 = vmatpush1.msra.mxu0 0.0
        %1449 = vmatprep.subr.mxu0 0.0
        %1450 = vmatpush1.msra.mxu0 0.0
        %1451 = vmatprep.subr.mxu0 0.0
        %1452 = vmatpush1.msra.mxu0 0.0
        %1453 = vmatprep.subr.mxu0 0.0
        %1454 = vmatpush1.msra.mxu0 0.0
        %1455 = vmatprep.subr.mxu0 0.0
        %1456 = vmatpush1.msra.mxu0 0.0
        %1457 = vmatprep.subr.mxu0 0.0
        %1458 = vmatpush1.msra.mxu0 0.0
        %1459 = vmatprep.subr.mxu0 0.0
        %1460 = vmatpush1.msra.mxu0 0.0
        %1461 = vmatprep.subr.mxu0 0.0
        %1462 = vmatpush1.msra.mxu0 0.0
        %1463 = vmatprep.subr.mxu0 0.0
        %1464 = vmatpush1.msra.mxu0 0.0
        %1465 = vmatprep.subr.mxu0 0.0
        %1466 = vmatpush1.msra.mxu0 0.0
        %1467 = vmatprep.subr.mxu0 0.0
        %1468 = vmatpush1.msra.mxu0 0.0
        %1469 = vmatprep.subr.mxu0 0.0
        %1470 = vmatpush1.msra.mxu0 0.0
        %1471 = vmatprep.subr.mxu0 0.0
        %1472 = vmatpush1.msra.mxu0 0.0
        %1473 = vmatprep.subr.mxu0 0.0
        %1474 = vmatpush1.msra.mxu0 0.0
        %1475 = vmatprep.subr.mxu0 0.0
        %1476 = vmatpush1.msra.mxu0 0.0
        %1477 = vmatprep.subr.mxu0 0.0
        %1478 = vmatpush1.msra.mxu0 0.0
        %1479 = vmatprep.subr.mxu0 0.0
        %1480 = vmatpush1.msra.mxu0 0.0
        %1481 = vmatprep.subr.mxu0 0.0
        %1482 = vmatpush1.msra.mxu0 0.0
        %1483 = vmatprep.subr.mxu0 0.0
        %1484 = vmatpush1.msra.mxu0 0.0
        %1485 = vmatprep.subr.mxu0 0.0
        %1486 = vmatpush1.msra.mxu0 0.0
        %1487 = vmatprep.subr.mxu0 0.0
        %1488 = vmatpush1.msra.mxu0 0.0
        %1489 = vmatprep.mubr.f32.mxu0 0.0
        %v1490 = vand.u32 %v1188, 4294901760
        %v1491 = vsub.f32 %v1188, %v1490
        %1492 = vmatmul.mubr.f32.gmra.mrb[0].mxu0 %v1491
        %v1493 = vpop.f32.mrb[0].mxu0
        %v1494 = vadd.f32 %v1396, %v1493
        %v1495 = vpop.f32.mrb[0].mxu0
        %1496 = vmatprep.mubr.f32.mxu0 0.0
        %v1497 = vand.u32 %v1191, 4294901760
        %v1498 = vsub.f32 %v1191, %v1497
        %1499 = vmatmul.mubr.f32.gmra.mrb[0].mxu0 %v1498
        %v1500 = vpop.f32.mrb[0].mxu0
        %v1501 = vadd.f32 %v1402, %v1500
        %v1502 = vpop.f32.mrb[0].mxu0
        %1503 = vmatprep.mubr.f32.mxu0 0.0
        %v1504 = vand.u32 %v1194, 4294901760
        %v1505 = vsub.f32 %v1194, %v1504
        %1506 = vmatmul.mubr.f32.gmra.mrb[0].mxu0 %v1505
        %v1507 = vpop.f32.mrb[0].mxu0
        %v1508 = vadd.f32 %v1408, %v1507
        %v1509 = vpop.f32.mrb[0].mxu0
        %1510 = vmatprep.mubr.f32.mxu0 0.0
        %v1511 = vand.u32 %v1197, 4294901760
        %v1512 = vsub.f32 %v1197, %v1511
        %1513 = vmatmul.mubr.f32.gmra.mrb[0].mxu0 %v1512
        %v1514 = vpop.f32.mrb[0].mxu0
        %v1515 = vadd.f32 %v1414, %v1514
        %v1516 = vpop.f32.mrb[0].mxu0
        %1517 = vdwg.mxu0
        %1518 = vmatprep.subr.mxu0 0.0
        %v1519 = vand.u32 %v1154, 4294901760
        %1520 = vmatpush1.msra.mxu0 %v1519
        %1521 = vmatprep.subr.mxu0 0.0
        %v1522 = vand.u32 %v1155, 4294901760
        %1523 = vmatpush1.msra.mxu0 %v1522
        %1524 = vmatprep.subr.mxu0 0.0
        %v1525 = vand.u32 %v1156, 4294901760
        %1526 = vmatpush1.msra.mxu0 %v1525
        %1527 = vmatprep.subr.mxu0 0.0
        %v1528 = vand.u32 %v1157, 4294901760
        %1529 = vmatpush1.msra.mxu0 %v1528
        %1530 = vmatprep.subr.mxu0 0.0
        %1531 = vmatpush1.msra.mxu0 0.0
        %1532 = vmatprep.subr.mxu0 0.0
        %1533 = vmatpush1.msra.mxu0 0.0
        %1534 = vmatprep.subr.mxu0 0.0
        %1535 = vmatpush1.msra.mxu0 0.0
        %1536 = vmatprep.subr.mxu0 0.0
        %1537 = vmatpush1.msra.mxu0 0.0
        %1538 = vmatprep.subr.mxu0 0.0
        %1539 = vmatpush1.msra.mxu0 0.0
        %1540 = vmatprep.subr.mxu0 0.0
        %1541 = vmatpush1.msra.mxu0 0.0
        %1542 = vmatprep.subr.mxu0 0.0
        %1543 = vmatpush1.msra.mxu0 0.0
        %1544 = vmatprep.subr.mxu0 0.0
        %1545 = vmatpush1.msra.mxu0 0.0
        %1546 = vmatprep.subr.mxu0 0.0
        %1547 = vmatpush1.msra.mxu0 0.0
        %1548 = vmatprep.subr.mxu0 0.0
        %1549 = vmatpush1.msra.mxu0 0.0
        %1550 = vmatprep.subr.mxu0 0.0
        %1551 = vmatpush1.msra.mxu0 0.0
        %1552 = vmatprep.subr.mxu0 0.0
        %1553 = vmatpush1.msra.mxu0 0.0
        %1554 = vmatprep.subr.mxu0 0.0
        %1555 = vmatpush1.msra.mxu0 0.0
        %1556 = vmatprep.subr.mxu0 0.0
        %1557 = vmatpush1.msra.mxu0 0.0
        %1558 = vmatprep.subr.mxu0 0.0
        %1559 = vmatpush1.msra.mxu0 0.0
        %1560 = vmatprep.subr.mxu0 0.0
        %1561 = vmatpush1.msra.mxu0 0.0
        %1562 = vmatprep.subr.mxu0 0.0
        %1563 = vmatpush1.msra.mxu0 0.0
        %1564 = vmatprep.subr.mxu0 0.0
        %1565 = vmatpush1.msra.mxu0 0.0
        %1566 = vmatprep.subr.mxu0 0.0
        %1567 = vmatpush1.msra.mxu0 0.0
        %1568 = vmatprep.subr.mxu0 0.0
        %1569 = vmatpush1.msra.mxu0 0.0
        %1570 = vmatprep.subr.mxu0 0.0
        %1571 = vmatpush1.msra.mxu0 0.0
        %1572 = vmatprep.subr.mxu0 0.0
        %1573 = vmatpush1.msra.mxu0 0.0
        %1574 = vmatprep.subr.mxu0 0.0
        %1575 = vmatpush1.msra.mxu0 0.0
        %1576 = vmatprep.subr.mxu0 0.0
        %1577 = vmatpush1.msra.mxu0 0.0
        %1578 = vmatprep.subr.mxu0 0.0
        %1579 = vmatpush1.msra.mxu0 0.0
        %1580 = vmatprep.subr.mxu0 0.0
        %1581 = vmatpush1.msra.mxu0 0.0
        %1582 = vmatprep.subr.mxu0 0.0
        %1583 = vmatpush1.msra.mxu0 0.0
        %1584 = vmatprep.subr.mxu0 0.0
        %1585 = vmatpush1.msra.mxu0 0.0
        %1586 = vmatprep.mubr.f32.mxu0 0.0
        %v1587 = vand.u32 %v1188, 4294901760
        %v1588 = vsub.f32 %v1188, %v1587
        %v1589 = vand.u32 %v1588, 4294901760
        %1590 = vmatmul.mubr.f32.gmra.mrb[0].mxu0 %v1589
        %v1591 = vpop.f32.mrb[0].mxu0
        %v1592 = vadd.f32 %v1494, %v1591
        %v1593 = vpop.f32.mrb[0].mxu0
        %1594 = vmatprep.mubr.f32.mxu0 0.0
        %v1595 = vand.u32 %v1191, 4294901760
        %v1596 = vsub.f32 %v1191, %v1595
        %v1597 = vand.u32 %v1596, 4294901760
        %1598 = vmatmul.mubr.f32.gmra.mrb[0].mxu0 %v1597
        %v1599 = vpop.f32.mrb[0].mxu0
        %v1600 = vadd.f32 %v1501, %v1599
        %v1601 = vpop.f32.mrb[0].mxu0
        %1602 = vmatprep.mubr.f32.mxu0 0.0
        %v1603 = vand.u32 %v1194, 4294901760
        %v1604 = vsub.f32 %v1194, %v1603
        %v1605 = vand.u32 %v1604, 4294901760
        %1606 = vmatmul.mubr.f32.gmra.mrb[0].mxu0 %v1605
        %v1607 = vpop.f32.mrb[0].mxu0
        %v1608 = vadd.f32 %v1508, %v1607
        %v1609 = vpop.f32.mrb[0].mxu0
        %1610 = vmatprep.mubr.f32.mxu0 0.0
        %v1611 = vand.u32 %v1197, 4294901760
        %v1612 = vsub.f32 %v1197, %v1611
        %v1613 = vand.u32 %v1612, 4294901760
        %1614 = vmatmul.mubr.f32.gmra.mrb[0].mxu0 %v1613
        %v1615 = vpop.f32.mrb[0].mxu0
        %v1616 = vadd.f32 %v1515, %v1615
        %v1617 = vpop.f32.mrb[0].mxu0
        %1618 = vdwg.mxu0
        %1619 = vmatprep.subr.mxu0 0.0
        %v1620 = vand.u32 %v1154, 4294901760
        %v1621 = vsub.f32 %v1154, %v1620
        %v1622 = vand.u32 %v1621, 4294901760
        %1623 = vmatpush1.msra.mxu0 %v1622
        %1624 = vmatprep.subr.mxu0 0.0
        %v1625 = vand.u32 %v1155, 4294901760
        %v1626 = vsub.f32 %v1155, %v1625
        %v1627 = vand.u32 %v1626, 4294901760
        %1628 = vmatpush1.msra.mxu0 %v1627
        %1629 = vmatprep.subr.mxu0 0.0
        %v1630 = vand.u32 %v1156, 4294901760
        %v1631 = vsub.f32 %v1156, %v1630
        %v1632 = vand.u32 %v1631, 4294901760
        %1633 = vmatpush1.msra.mxu0 %v1632
        %1634 = vmatprep.subr.mxu0 0.0
        %v1635 = vand.u32 %v1157, 4294901760
        %v1636 = vsub.f32 %v1157, %v1635
        %v1637 = vand.u32 %v1636, 4294901760
        %1638 = vmatpush1.msra.mxu0 %v1637
        %1639 = vmatprep.subr.mxu0 0.0
        %1640 = vmatpush1.msra.mxu0 0.0
        %1641 = vmatprep.subr.mxu0 0.0
        %1642 = vmatpush1.msra.mxu0 0.0
        %1643 = vmatprep.subr.mxu0 0.0
        %1644 = vmatpush1.msra.mxu0 0.0
        %1645 = vmatprep.subr.mxu0 0.0
        %1646 = vmatpush1.msra.mxu0 0.0
        %1647 = vmatprep.subr.mxu0 0.0
        %1648 = vmatpush1.msra.mxu0 0.0
        %1649 = vmatprep.subr.mxu0 0.0
        %1650 = vmatpush1.msra.mxu0 0.0
        %1651 = vmatprep.subr.mxu0 0.0
        %1652 = vmatpush1.msra.mxu0 0.0
        %1653 = vmatprep.subr.mxu0 0.0
        %1654 = vmatpush1.msra.mxu0 0.0
        %1655 = vmatprep.subr.mxu0 0.0
        %1656 = vmatpush1.msra.mxu0 0.0
        %1657 = vmatprep.subr.mxu0 0.0
        %1658 = vmatpush1.msra.mxu0 0.0
        %1659 = vmatprep.subr.mxu0 0.0
        %1660 = vmatpush1.msra.mxu0 0.0
        %1661 = vmatprep.subr.mxu0 0.0
        %1662 = vmatpush1.msra.mxu0 0.0
        %1663 = vmatprep.subr.mxu0 0.0
        %1664 = vmatpush1.msra.mxu0 0.0
        %1665 = vmatprep.subr.mxu0 0.0
        %1666 = vmatpush1.msra.mxu0 0.0
        %1667 = vmatprep.subr.mxu0 0.0
        %1668 = vmatpush1.msra.mxu0 0.0
        %1669 = vmatprep.subr.mxu0 0.0
        %1670 = vmatpush1.msra.mxu0 0.0
        %1671 = vmatprep.subr.mxu0 0.0
        %1672 = vmatpush1.msra.mxu0 0.0
        %1673 = vmatprep.subr.mxu0 0.0
        %1674 = vmatpush1.msra.mxu0 0.0
        %1675 = vmatprep.subr.mxu0 0.0
        %1676 = vmatpush1.msra.mxu0 0.0
        %1677 = vmatprep.subr.mxu0 0.0
        %1678 = vmatpush1.msra.mxu0 0.0
        %1679 = vmatprep.subr.mxu0 0.0
        %1680 = vmatpush1.msra.mxu0 0.0
        %1681 = vmatprep.subr.mxu0 0.0
        %1682 = vmatpush1.msra.mxu0 0.0
        %1683 = vmatprep.subr.mxu0 0.0
        %1684 = vmatpush1.msra.mxu0 0.0
        %1685 = vmatprep.subr.mxu0 0.0
        %1686 = vmatpush1.msra.mxu0 0.0
        %1687 = vmatprep.subr.mxu0 0.0
        %1688 = vmatpush1.msra.mxu0 0.0
        %1689 = vmatprep.subr.mxu0 0.0
        %1690 = vmatpush1.msra.mxu0 0.0
        %1691 = vmatprep.subr.mxu0 0.0
        %1692 = vmatpush1.msra.mxu0 0.0
        %1693 = vmatprep.subr.mxu0 0.0
        %1694 = vmatpush1.msra.mxu0 0.0
        %1695 = vmatprep.mubr.f32.mxu0 0.0
        %v1696 = vand.u32 %v1188, 4294901760
        %1697 = vmatmul.mubr.f32.gmra.mrb[0].mxu0 %v1696
        %v1698 = vpop.f32.mrb[0].mxu0
        %v1699 = vadd.f32 %v1592, %v1698
        %v1700 = vpop.f32.mrb[0].mxu0
        %1701 = vmatprep.mubr.f32.mxu0 0.0
        %v1702 = vand.u32 %v1191, 4294901760
        %1703 = vmatmul.mubr.f32.gmra.mrb[0].mxu0 %v1702
        %v1704 = vpop.f32.mrb[0].mxu0
        %v1705 = vadd.f32 %v1600, %v1704
        %v1706 = vpop.f32.mrb[0].mxu0
        %1707 = vmatprep.mubr.f32.mxu0 0.0
        %v1708 = vand.u32 %v1194, 4294901760
        %1709 = vmatmul.mubr.f32.gmra.mrb[0].mxu0 %v1708
        %v1710 = vpop.f32.mrb[0].mxu0
        %v1711 = vadd.f32 %v1608, %v1710
        %v1712 = vpop.f32.mrb[0].mxu0
        %1713 = vmatprep.mubr.f32.mxu0 0.0
        %v1714 = vand.u32 %v1197, 4294901760
        %1715 = vmatmul.mubr.f32.gmra.mrb[0].mxu0 %v1714
        %v1716 = vpop.f32.mrb[0].mxu0
        %v1717 = vadd.f32 %v1616, %v1716
        %v1718 = vpop.f32.mrb[0].mxu0
        %1719 = vdwg.mxu0
        %1720 = vmatprep.subr.mxu0 0.0
        %v1721 = vand.u32 %v1154, 4294901760
        %1722 = vmatpush1.msra.mxu0 %v1721
        %1723 = vmatprep.subr.mxu0 0.0
        %v1724 = vand.u32 %v1155, 4294901760
        %1725 = vmatpush1.msra.mxu0 %v1724
        %1726 = vmatprep.subr.mxu0 0.0
        %v1727 = vand.u32 %v1156, 4294901760
        %1728 = vmatpush1.msra.mxu0 %v1727
        %1729 = vmatprep.subr.mxu0 0.0
        %v1730 = vand.u32 %v1157, 4294901760
        %1731 = vmatpush1.msra.mxu0 %v1730
        %1732 = vmatprep.subr.mxu0 0.0
        %1733 = vmatpush1.msra.mxu0 0.0
        %1734 = vmatprep.subr.mxu0 0.0
        %1735 = vmatpush1.msra.mxu0 0.0
        %1736 = vmatprep.subr.mxu0 0.0
        %1737 = vmatpush1.msra.mxu0 0.0
        %1738 = vmatprep.subr.mxu0 0.0
        %1739 = vmatpush1.msra.mxu0 0.0
        %1740 = vmatprep.subr.mxu0 0.0
        %1741 = vmatpush1.msra.mxu0 0.0
        %1742 = vmatprep.subr.mxu0 0.0
        %1743 = vmatpush1.msra.mxu0 0.0
        %1744 = vmatprep.subr.mxu0 0.0
        %1745 = vmatpush1.msra.mxu0 0.0
        %1746 = vmatprep.subr.mxu0 0.0
        %1747 = vmatpush1.msra.mxu0 0.0
        %1748 = vmatprep.subr.mxu0 0.0
        %1749 = vmatpush1.msra.mxu0 0.0
        %1750 = vmatprep.subr.mxu0 0.0
        %1751 = vmatpush1.msra.mxu0 0.0
        %1752 = vmatprep.subr.mxu0 0.0
        %1753 = vmatpush1.msra.mxu0 0.0
        %1754 = vmatprep.subr.mxu0 0.0
        %1755 = vmatpush1.msra.mxu0 0.0
        %1756 = vmatprep.subr.mxu0 0.0
        %1757 = vmatpush1.msra.mxu0 0.0
        %1758 = vmatprep.subr.mxu0 0.0
        %1759 = vmatpush1.msra.mxu0 0.0
        %1760 = vmatprep.subr.mxu0 0.0
        %1761 = vmatpush1.msra.mxu0 0.0
        %1762 = vmatprep.subr.mxu0 0.0
        %1763 = vmatpush1.msra.mxu0 0.0
        %1764 = vmatprep.subr.mxu0 0.0
        %1765 = vmatpush1.msra.mxu0 0.0
        %1766 = vmatprep.subr.mxu0 0.0
        %1767 = vmatpush1.msra.mxu0 0.0
        %1768 = vmatprep.subr.mxu0 0.0
        %1769 = vmatpush1.msra.mxu0 0.0
        %1770 = vmatprep.subr.mxu0 0.0
        %1771 = vmatpush1.msra.mxu0 0.0
        %1772 = vmatprep.subr.mxu0 0.0
        %1773 = vmatpush1.msra.mxu0 0.0
        %1774 = vmatprep.subr.mxu0 0.0
        %1775 = vmatpush1.msra.mxu0 0.0
        %1776 = vmatprep.subr.mxu0 0.0
        %1777 = vmatpush1.msra.mxu0 0.0
        %1778 = vmatprep.subr.mxu0 0.0
        %1779 = vmatpush1.msra.mxu0 0.0
        %1780 = vmatprep.subr.mxu0 0.0
        %1781 = vmatpush1.msra.mxu0 0.0
        %1782 = vmatprep.subr.mxu0 0.0
        %1783 = vmatpush1.msra.mxu0 0.0
        %1784 = vmatprep.subr.mxu0 0.0
        %1785 = vmatpush1.msra.mxu0 0.0
        %1786 = vmatprep.subr.mxu0 0.0
        %1787 = vmatpush1.msra.mxu0 0.0
        %1788 = vmatprep.mubr.f32.mxu0 0.0
        %v1789 = vand.u32 %v1188, 4294901760
        %1790 = vmatmul.mubr.f32.gmra.mrb[0].mxu0 %v1789
        %v1791 = vpop.f32.mrb[0].mxu0
        %v1792 = vadd.f32 %v1699, %v1791
        %v1793 = vpop.f32.mrb[0].mxu0
        %1794 = vmatprep.mubr.f32.mxu0 0.0
        %v1795 = vand.u32 %v1191, 4294901760
        %1796 = vmatmul.mubr.f32.gmra.mrb[0].mxu0 %v1795
        %v1797 = vpop.f32.mrb[0].mxu0
        %v1798 = vadd.f32 %v1705, %v1797
        %v1799 = vpop.f32.mrb[0].mxu0
        %1800 = vmatprep.mubr.f32.mxu0 0.0
        %v1801 = vand.u32 %v1194, 4294901760
        %1802 = vmatmul.mubr.f32.gmra.mrb[0].mxu0 %v1801
        %v1803 = vpop.f32.mrb[0].mxu0
        %v1804 = vadd.f32 %v1711, %v1803
        %v1805 = vpop.f32.mrb[0].mxu0
        %1806 = vmatprep.mubr.f32.mxu0 0.0
        %v1807 = vand.u32 %v1197, 4294901760
        %1808 = vmatmul.mubr.f32.gmra.mrb[0].mxu0 %v1807
        %v1809 = vpop.f32.mrb[0].mxu0
        %v1810 = vadd.f32 %v1717, %v1809
        %v1811 = vpop.f32.mrb[0].mxu0
        %1812 = vdwg.mxu0
        %v1813 = vmax.f32 %v1792, 0.0
        %v1814 = vmax.f32 %v1798, 0.0
        %v1815 = vmax.f32 %v1804, 0.0
        %v1816 = vmax.f32 %v1810, 0.0
        %v1817 = vld [vmem:[%s5] sm:$0x3]
        %v1818 = vld [vmem:[%s6] sm:$0x3]
        %1820 = vset.pattern.permute.xlu0 0
        %1821 = vperm.xlu0 %1820, %v1818
        %v1822 = vpop.permute.xlu0 %1821
        %v1825 = vsel %vm1186, %v1817, 0
        %1827 = vmatprep.subr.mxu0 0.0
        %v1828 = vand.u32 %v1813, 4294901760
        %1829 = vmatpush1.msra.mxu0 %v1828
        %1830 = vmatprep.subr.mxu0 0.0
        %v1831 = vand.u32 %v1814, 4294901760
        %1832 = vmatpush1.msra.mxu0 %v1831
        %1833 = vmatprep.subr.mxu0 0.0
        %v1834 = vand.u32 %v1815, 4294901760
        %1835 = vmatpush1.msra.mxu0 %v1834
        %1836 = vmatprep.subr.mxu0 0.0
        %v1837 = vand.u32 %v1816, 4294901760
        %1838 = vmatpush1.msra.mxu0 %v1837
        %1839 = vmatprep.subr.mxu0 0.0
        %1840 = vmatpush1.msra.mxu0 0.0
        %1841 = vmatprep.subr.mxu0 0.0
        %1842 = vmatpush1.msra.mxu0 0.0
        %1843 = vmatprep.subr.mxu0 0.0
        %1844 = vmatpush1.msra.mxu0 0.0
        %1845 = vmatprep.subr.mxu0 0.0
        %1846 = vmatpush1.msra.mxu0 0.0
        %1847 = vmatprep.subr.mxu0 0.0
        %1848 = vmatpush1.msra.mxu0 0.0
        %1849 = vmatprep.subr.mxu0 0.0
        %1850 = vmatpush1.msra.mxu0 0.0
        %1851 = vmatprep.subr.mxu0 0.0
        %1852 = vmatpush1.msra.mxu0 0.0
        %1853 = vmatprep.subr.mxu0 0.0
        %1854 = vmatpush1.msra.mxu0 0.0
        %1855 = vmatprep.subr.mxu0 0.0
        %1856 = vmatpush1.msra.mxu0 0.0
        %1857 = vmatprep.subr.mxu0 0.0
        %1858 = vmatpush1.msra.mxu0 0.0
        %1859 = vmatprep.subr.mxu0 0.0
        %1860 = vmatpush1.msra.mxu0 0.0
        %1861 = vmatprep.subr.mxu0 0.0
        %1862 = vmatpush1.msra.mxu0 0.0
        %1863 = vmatprep.subr.mxu0 0.0
        %1864 = vmatpush1.msra.mxu0 0.0
        %1865 = vmatprep.subr.mxu0 0.0
        %1866 = vmatpush1.msra.mxu0 0.0
        %1867 = vmatprep.subr.mxu0 0.0
        %1868 = vmatpush1.msra.mxu0 0.0
        %1869 = vmatprep.subr.mxu0 0.0
        %1870 = vmatpush1.msra.mxu0 0.0
        %1871 = vmatprep.subr.mxu0 0.0
        %1872 = vmatpush1.msra.mxu0 0.0
        %1873 = vmatprep.subr.mxu0 0.0
        %1874 = vmatpush1.msra.mxu0 0.0
        %1875 = vmatprep.subr.mxu0 0.0
        %1876 = vmatpush1.msra.mxu0 0.0
        %1877 = vmatprep.subr.mxu0 0.0
        %1878 = vmatpush1.msra.mxu0 0.0
        %1879 = vmatprep.subr.mxu0 0.0
        %1880 = vmatpush1.msra.mxu0 0.0
        %1881 = vmatprep.subr.mxu0 0.0
        %1882 = vmatpush1.msra.mxu0 0.0
        %1883 = vmatprep.subr.mxu0 0.0
        %1884 = vmatpush1.msra.mxu0 0.0
        %1885 = vmatprep.subr.mxu0 0.0
        %1886 = vmatpush1.msra.mxu0 0.0
        %1887 = vmatprep.subr.mxu0 0.0
        %1888 = vmatpush1.msra.mxu0 0.0
        %1889 = vmatprep.subr.mxu0 0.0
        %1890 = vmatpush1.msra.mxu0 0.0
        %1891 = vmatprep.subr.mxu0 0.0
        %1892 = vmatpush1.msra.mxu0 0.0
        %1893 = vmatprep.subr.mxu0 0.0
        %1894 = vmatpush1.msra.mxu0 0.0
        %1895 = vmatprep.mubr.f32.mxu0 0.0
        %v1896 = vand.u32 %v1825, 4294901760
        %v1897 = vsub.f32 %v1825, %v1896
        %v1898 = vand.u32 %v1897, 4294901760
        %v1899 = vsub.f32 %v1897, %v1898
        %v1900 = vand.u32 %v1899, 4294901760
        %1901 = vmatmul.mubr.f32.gmra.mrb[0].mxu0 %v1900
        %v1902 = vpop.f32.mrb[0].mxu0
        %v1903 = vadd.f32 %v1822, %v1902
        %v1904 = vpop.f32.mrb[0].mxu0
        %1905 = vdwg.mxu0
        %1906 = vmatprep.subr.mxu0 0.0
        %v1907 = vand.u32 %v1813, 4294901760
        %v1908 = vsub.f32 %v1813, %v1907
        %v1909 = vand.u32 %v1908, 4294901760
        %v1910 = vsub.f32 %v1908, %v1909
        %v1911 = vand.u32 %v1910, 4294901760
        %1912 = vmatpush1.msra.mxu0 %v1911
        %1913 = vmatprep.subr.mxu0 0.0
        %v1914 = vand.u32 %v1814, 4294901760
        %v1915 = vsub.f32 %v1814, %v1914
        %v1916 = vand.u32 %v1915, 4294901760
        %v1917 = vsub.f32 %v1915, %v1916
        %v1918 = vand.u32 %v1917, 4294901760
        %1919 = vmatpush1.msra.mxu0 %v1918
        %1920 = vmatprep.subr.mxu0 0.0
        %v1921 = vand.u32 %v1815, 4294901760
        %v1922 = vsub.f32 %v1815, %v1921
        %v1923 = vand.u32 %v1922, 4294901760
        %v1924 = vsub.f32 %v1922, %v1923
        %v1925 = vand.u32 %v1924, 4294901760
        %1926 = vmatpush1.msra.mxu0 %v1925
        %1927 = vmatprep.subr.mxu0 0.0
        %v1928 = vand.u32 %v1816, 4294901760
        %v1929 = vsub.f32 %v1816, %v1928
        %v1930 = vand.u32 %v1929, 4294901760
        %v1931 = vsub.f32 %v1929, %v1930
        %v1932 = vand.u32 %v1931, 4294901760
        %1933 = vmatpush1.msra.mxu0 %v1932
        %1934 = vmatprep.subr.mxu0 0.0
        %1935 = vmatpush1.msra.mxu0 0.0
        %1936 = vmatprep.subr.mxu0 0.0
        %1937 = vmatpush1.msra.mxu0 0.0
        %1938 = vmatprep.subr.mxu0 0.0
        %1939 = vmatpush1.msra.mxu0 0.0
        %1940 = vmatprep.subr.mxu0 0.0
        %1941 = vmatpush1.msra.mxu0 0.0
        %1942 = vmatprep.subr.mxu0 0.0
        %1943 = vmatpush1.msra.mxu0 0.0
        %1944 = vmatprep.subr.mxu0 0.0
        %1945 = vmatpush1.msra.mxu0 0.0
        %1946 = vmatprep.subr.mxu0 0.0
        %1947 = vmatpush1.msra.mxu0 0.0
        %1948 = vmatprep.subr.mxu0 0.0
        %1949 = vmatpush1.msra.mxu0 0.0
        %1950 = vmatprep.subr.mxu0 0.0
        %1951 = vmatpush1.msra.mxu0 0.0
        %1952 = vmatprep.subr.mxu0 0.0
        %1953 = vmatpush1.msra.mxu0 0.0
        %1954 = vmatprep.subr.mxu0 0.0
        %1955 = vmatpush1.msra.mxu0 0.0
        %1956 = vmatprep.subr.mxu0 0.0
        %1957 = vmatpush1.msra.mxu0 0.0
        %1958 = vmatprep.subr.mxu0 0.0
        %1959 = vmatpush1.msra.mxu0 0.0
        %1960 = vmatprep.subr.mxu0 0.0
        %1961 = vmatpush1.msra.mxu0 0.0
        %1962 = vmatprep.subr.mxu0 0.0
        %1963 = vmatpush1.msra.mxu0 0.0
        %1964 = vmatprep.subr.mxu0 0.0
        %1965 = vmatpush1.msra.mxu0 0.0
        %1966 = vmatprep.subr.mxu0 0.0
        %1967 = vmatpush1.msra.mxu0 0.0
        %1968 = vmatprep.subr.mxu0 0.0
        %1969 = vmatpush1.msra.mxu0 0.0
        %1970 = vmatprep.subr.mxu0 0.0
        %1971 = vmatpush1.msra.mxu0 0.0
        %1972 = vmatprep.subr.mxu0 0.0
        %1973 = vmatpush1.msra.mxu0 0.0
        %1974 = vmatprep.subr.mxu0 0.0
        %1975 = vmatpush1.msra.mxu0 0.0
        %1976 = vmatprep.subr.mxu0 0.0
        %1977 = vmatpush1.msra.mxu0 0.0
        %1978 = vmatprep.subr.mxu0 0.0
        %1979 = vmatpush1.msra.mxu0 0.0
        %1980 = vmatprep.subr.mxu0 0.0
        %1981 = vmatpush1.msra.mxu0 0.0
        %1982 = vmatprep.subr.mxu0 0.0
        %1983 = vmatpush1.msra.mxu0 0.0
        %1984 = vmatprep.subr.mxu0 0.0
        %1985 = vmatpush1.msra.mxu0 0.0
        %1986 = vmatprep.subr.mxu0 0.0
        %1987 = vmatpush1.msra.mxu0 0.0
        %1988 = vmatprep.subr.mxu0 0.0
        %1989 = vmatpush1.msra.mxu0 0.0
        %1990 = vmatprep.mubr.f32.mxu0 0.0
        %v1991 = vand.u32 %v1825, 4294901760
        %1992 = vmatmul.mubr.f32.gmra.mrb[0].mxu0 %v1991
        %v1993 = vpop.f32.mrb[0].mxu0
        %v1994 = vadd.f32 %v1903, %v1993
        %v1995 = vpop.f32.mrb[0].mxu0
        %1996 = vdwg.mxu0
        %1997 = vmatprep.subr.mxu0 0.0
        %v1998 = vand.u32 %v1813, 4294901760
        %v1999 = vsub.f32 %v1813, %v1998
        %2000 = vmatpush1.msra.mxu0 %v1999
        %2001 = vmatprep.subr.mxu0 0.0
        %v2002 = vand.u32 %v1814, 4294901760
        %v2003 = vsub.f32 %v1814, %v2002
        %2004 = vmatpush1.msra.mxu0 %v2003
        %2005 = vmatprep.subr.mxu0 0.0
        %v2006 = vand.u32 %v1815, 4294901760
        %v2007 = vsub.f32 %v1815, %v2006
        %2008 = vmatpush1.msra.mxu0 %v2007
        %2009 = vmatprep.subr.mxu0 0.0
        %v2010 = vand.u32 %v1816, 4294901760
        %v2011 = vsub.f32 %v1816, %v2010
        %2012 = vmatpush1.msra.mxu0 %v2011
        %2013 = vmatprep.subr.mxu0 0.0
        %2014 = vmatpush1.msra.mxu0 0.0
        %2015 = vmatprep.subr.mxu0 0.0
        %2016 = vmatpush1.msra.mxu0 0.0
        %2017 = vmatprep.subr.mxu0 0.0
        %2018 = vmatpush1.msra.mxu0 0.0
        %2019 = vmatprep.subr.mxu0 0.0
        %2020 = vmatpush1.msra.mxu0 0.0
        %2021 = vmatprep.subr.mxu0 0.0
        %2022 = vmatpush1.msra.mxu0 0.0
        %2023 = vmatprep.subr.mxu0 0.0
        %2024 = vmatpush1.msra.mxu0 0.0
        %2025 = vmatprep.subr.mxu0 0.0
        %2026 = vmatpush1.msra.mxu0 0.0
        %2027 = vmatprep.subr.mxu0 0.0
        %2028 = vmatpush1.msra.mxu0 0.0
        %2029 = vmatprep.subr.mxu0 0.0
        %2030 = vmatpush1.msra.mxu0 0.0
        %2031 = vmatprep.subr.mxu0 0.0
        %2032 = vmatpush1.msra.mxu0 0.0
        %2033 = vmatprep.subr.mxu0 0.0
        %2034 = vmatpush1.msra.mxu0 0.0
        %2035 = vmatprep.subr.mxu0 0.0
        %2036 = vmatpush1.msra.mxu0 0.0
        %2037 = vmatprep.subr.mxu0 0.0
        %2038 = vmatpush1.msra.mxu0 0.0
        %2039 = vmatprep.subr.mxu0 0.0
        %2040 = vmatpush1.msra.mxu0 0.0
        %2041 = vmatprep.subr.mxu0 0.0
        %2042 = vmatpush1.msra.mxu0 0.0
        %2043 = vmatprep.subr.mxu0 0.0
        %2044 = vmatpush1.msra.mxu0 0.0
        %2045 = vmatprep.subr.mxu0 0.0
        %2046 = vmatpush1.msra.mxu0 0.0
        %2047 = vmatprep.subr.mxu0 0.0
        %2048 = vmatpush1.msra.mxu0 0.0
        %2049 = vmatprep.subr.mxu0 0.0
        %2050 = vmatpush1.msra.mxu0 0.0
        %2051 = vmatprep.subr.mxu0 0.0
        %2052 = vmatpush1.msra.mxu0 0.0
        %2053 = vmatprep.subr.mxu0 0.0
        %2054 = vmatpush1.msra.mxu0 0.0
        %2055 = vmatprep.subr.mxu0 0.0
        %2056 = vmatpush1.msra.mxu0 0.0
        %2057 = vmatprep.subr.mxu0 0.0
        %2058 = vmatpush1.msra.mxu0 0.0
        %2059 = vmatprep.subr.mxu0 0.0
        %2060 = vmatpush1.msra.mxu0 0.0
        %2061 = vmatprep.subr.mxu0 0.0
        %2062 = vmatpush1.msra.mxu0 0.0
        %2063 = vmatprep.subr.mxu0 0.0
        %2064 = vmatpush1.msra.mxu0 0.0
        %2065 = vmatprep.subr.mxu0 0.0
        %2066 = vmatpush1.msra.mxu0 0.0
        %2067 = vmatprep.subr.mxu0 0.0
        %2068 = vmatpush1.msra.mxu0 0.0
        %2069 = vmatprep.mubr.f32.mxu0 0.0
        %v2070 = vand.u32 %v1825, 4294901760
        %v2071 = vsub.f32 %v1825, %v2070
        %2072 = vmatmul.mubr.f32.gmra.mrb[0].mxu0 %v2071
        %v2073 = vpop.f32.mrb[0].mxu0
        %v2074 = vadd.f32 %v1994, %v2073
        %v2075 = vpop.f32.mrb[0].mxu0
        %2076 = vdwg.mxu0
        %2077 = vmatprep.subr.mxu0 0.0
        %v2078 = vand.u32 %v1813, 4294901760
        %2079 = vmatpush1.msra.mxu0 %v2078
        %2080 = vmatprep.subr.mxu0 0.0
        %v2081 = vand.u32 %v1814, 4294901760
        %2082 = vmatpush1.msra.mxu0 %v2081
        %2083 = vmatprep.subr.mxu0 0.0
        %v2084 = vand.u32 %v1815, 4294901760
        %2085 = vmatpush1.msra.mxu0 %v2084
        %2086 = vmatprep.subr.mxu0 0.0
        %v2087 = vand.u32 %v1816, 4294901760
        %2088 = vmatpush1.msra.mxu0 %v2087
        %2089 = vmatprep.subr.mxu0 0.0
        %2090 = vmatpush1.msra.mxu0 0.0
        %2091 = vmatprep.subr.mxu0 0.0
        %2092 = vmatpush1.msra.mxu0 0.0
        %2093 = vmatprep.subr.mxu0 0.0
        %2094 = vmatpush1.msra.mxu0 0.0
        %2095 = vmatprep.subr.mxu0 0.0
        %2096 = vmatpush1.msra.mxu0 0.0
        %2097 = vmatprep.subr.mxu0 0.0
        %2098 = vmatpush1.msra.mxu0 0.0
        %2099 = vmatprep.subr.mxu0 0.0
        %2100 = vmatpush1.msra.mxu0 0.0
        %2101 = vmatprep.subr.mxu0 0.0
        %2102 = vmatpush1.msra.mxu0 0.0
        %2103 = vmatprep.subr.mxu0 0.0
        %2104 = vmatpush1.msra.mxu0 0.0
        %2105 = vmatprep.subr.mxu0 0.0
        %2106 = vmatpush1.msra.mxu0 0.0
        %2107 = vmatprep.subr.mxu0 0.0
        %2108 = vmatpush1.msra.mxu0 0.0
        %2109 = vmatprep.subr.mxu0 0.0
        %2110 = vmatpush1.msra.mxu0 0.0
        %2111 = vmatprep.subr.mxu0 0.0
        %2112 = vmatpush1.msra.mxu0 0.0
        %2113 = vmatprep.subr.mxu0 0.0
        %2114 = vmatpush1.msra.mxu0 0.0
        %2115 = vmatprep.subr.mxu0 0.0
        %2116 = vmatpush1.msra.mxu0 0.0
        %2117 = vmatprep.subr.mxu0 0.0
        %2118 = vmatpush1.msra.mxu0 0.0
        %2119 = vmatprep.subr.mxu0 0.0
        %2120 = vmatpush1.msra.mxu0 0.0
        %2121 = vmatprep.subr.mxu0 0.0
        %2122 = vmatpush1.msra.mxu0 0.0
        %2123 = vmatprep.subr.mxu0 0.0
        %2124 = vmatpush1.msra.mxu0 0.0
        %2125 = vmatprep.subr.mxu0 0.0
        %2126 = vmatpush1.msra.mxu0 0.0
        %2127 = vmatprep.subr.mxu0 0.0
        %2128 = vmatpush1.msra.mxu0 0.0
        %2129 = vmatprep.subr.mxu0 0.0
        %2130 = vmatpush1.msra.mxu0 0.0
        %2131 = vmatprep.subr.mxu0 0.0
        %2132 = vmatpush1.msra.mxu0 0.0
        %2133 = vmatprep.subr.mxu0 0.0
        %2134 = vmatpush1.msra.mxu0 0.0
        %2135 = vmatprep.subr.mxu0 0.0
        %2136 = vmatpush1.msra.mxu0 0.0
        %2137 = vmatprep.subr.mxu0 0.0
        %2138 = vmatpush1.msra.mxu0 0.0
        %2139 = vmatprep.subr.mxu0 0.0
        %2140 = vmatpush1.msra.mxu0 0.0
        %2141 = vmatprep.subr.mxu0 0.0
        %2142 = vmatpush1.msra.mxu0 0.0
        %2143 = vmatprep.subr.mxu0 0.0
        %2144 = vmatpush1.msra.mxu0 0.0
        %2145 = vmatprep.mubr.f32.mxu0 0.0
        %v2146 = vand.u32 %v1825, 4294901760
        %v2147 = vsub.f32 %v1825, %v2146
        %v2148 = vand.u32 %v2147, 4294901760
        %2149 = vmatmul.mubr.f32.gmra.mrb[0].mxu0 %v2148
        %v2150 = vpop.f32.mrb[0].mxu0
        %v2151 = vadd.f32 %v2074, %v2150
        %v2152 = vpop.f32.mrb[0].mxu0
        %2153 = vdwg.mxu0
        %2154 = vmatprep.subr.mxu0 0.0
        %v2155 = vand.u32 %v1813, 4294901760
        %v2156 = vsub.f32 %v1813, %v2155
        %v2157 = vand.u32 %v2156, 4294901760
        %2158 = vmatpush1.msra.mxu0 %v2157
        %2159 = vmatprep.subr.mxu0 0.0
        %v2160 = vand.u32 %v1814, 4294901760
        %v2161 = vsub.f32 %v1814, %v2160
        %v2162 = vand.u32 %v2161, 4294901760
        %2163 = vmatpush1.msra.mxu0 %v2162
        %2164 = vmatprep.subr.mxu0 0.0
        %v2165 = vand.u32 %v1815, 4294901760
        %v2166 = vsub.f32 %v1815, %v2165
        %v2167 = vand.u32 %v2166, 4294901760
        %2168 = vmatpush1.msra.mxu0 %v2167
        %2169 = vmatprep.subr.mxu0 0.0
        %v2170 = vand.u32 %v1816, 4294901760
        %v2171 = vsub.f32 %v1816, %v2170
        %v2172 = vand.u32 %v2171, 4294901760
        %2173 = vmatpush1.msra.mxu0 %v2172
        %2174 = vmatprep.subr.mxu0 0.0
        %2175 = vmatpush1.msra.mxu0 0.0
        %2176 = vmatprep.subr.mxu0 0.0
        %2177 = vmatpush1.msra.mxu0 0.0
        %2178 = vmatprep.subr.mxu0 0.0
        %2179 = vmatpush1.msra.mxu0 0.0
        %2180 = vmatprep.subr.mxu0 0.0
        %2181 = vmatpush1.msra.mxu0 0.0
        %2182 = vmatprep.subr.mxu0 0.0
        %2183 = vmatpush1.msra.mxu0 0.0
        %2184 = vmatprep.subr.mxu0 0.0
        %2185 = vmatpush1.msra.mxu0 0.0
        %2186 = vmatprep.subr.mxu0 0.0
        %2187 = vmatpush1.msra.mxu0 0.0
        %2188 = vmatprep.subr.mxu0 0.0
        %2189 = vmatpush1.msra.mxu0 0.0
        %2190 = vmatprep.subr.mxu0 0.0
        %2191 = vmatpush1.msra.mxu0 0.0
        %2192 = vmatprep.subr.mxu0 0.0
        %2193 = vmatpush1.msra.mxu0 0.0
        %2194 = vmatprep.subr.mxu0 0.0
        %2195 = vmatpush1.msra.mxu0 0.0
        %2196 = vmatprep.subr.mxu0 0.0
        %2197 = vmatpush1.msra.mxu0 0.0
        %2198 = vmatprep.subr.mxu0 0.0
        %2199 = vmatpush1.msra.mxu0 0.0
        %2200 = vmatprep.subr.mxu0 0.0
        %2201 = vmatpush1.msra.mxu0 0.0
        %2202 = vmatprep.subr.mxu0 0.0
        %2203 = vmatpush1.msra.mxu0 0.0
        %2204 = vmatprep.subr.mxu0 0.0
        %2205 = vmatpush1.msra.mxu0 0.0
        %2206 = vmatprep.subr.mxu0 0.0
        %2207 = vmatpush1.msra.mxu0 0.0
        %2208 = vmatprep.subr.mxu0 0.0
        %2209 = vmatpush1.msra.mxu0 0.0
        %2210 = vmatprep.subr.mxu0 0.0
        %2211 = vmatpush1.msra.mxu0 0.0
        %2212 = vmatprep.subr.mxu0 0.0
        %2213 = vmatpush1.msra.mxu0 0.0
        %2214 = vmatprep.subr.mxu0 0.0
        %2215 = vmatpush1.msra.mxu0 0.0
        %2216 = vmatprep.subr.mxu0 0.0
        %2217 = vmatpush1.msra.mxu0 0.0
        %2218 = vmatprep.subr.mxu0 0.0
        %2219 = vmatpush1.msra.mxu0 0.0
        %2220 = vmatprep.subr.mxu0 0.0
        %2221 = vmatpush1.msra.mxu0 0.0
        %2222 = vmatprep.subr.mxu0 0.0
        %2223 = vmatpush1.msra.mxu0 0.0
        %2224 = vmatprep.subr.mxu0 0.0
        %2225 = vmatpush1.msra.mxu0 0.0
        %2226 = vmatprep.subr.mxu0 0.0
        %2227 = vmatpush1.msra.mxu0 0.0
        %2228 = vmatprep.subr.mxu0 0.0
        %2229 = vmatpush1.msra.mxu0 0.0
        %2230 = vmatprep.mubr.f32.mxu0 0.0
        %v2231 = vand.u32 %v1825, 4294901760
        %2232 = vmatmul.mubr.f32.gmra.mrb[0].mxu0 %v2231
        %v2233 = vpop.f32.mrb[0].mxu0
        %v2234 = vadd.f32 %v2151, %v2233
        %v2235 = vpop.f32.mrb[0].mxu0
        %2236 = vdwg.mxu0
        %2237 = vmatprep.subr.mxu0 0.0
        %v2238 = vand.u32 %v1813, 4294901760
        %2239 = vmatpush1.msra.mxu0 %v2238
        %2240 = vmatprep.subr.mxu0 0.0
        %v2241 = vand.u32 %v1814, 4294901760
        %2242 = vmatpush1.msra.mxu0 %v2241
        %2243 = vmatprep.subr.mxu0 0.0
        %v2244 = vand.u32 %v1815, 4294901760
        %2245 = vmatpush1.msra.mxu0 %v2244
        %2246 = vmatprep.subr.mxu0 0.0
        %v2247 = vand.u32 %v1816, 4294901760
        %2248 = vmatpush1.msra.mxu0 %v2247
        %2249 = vmatprep.subr.mxu0 0.0
        %2250 = vmatpush1.msra.mxu0 0.0
        %2251 = vmatprep.subr.mxu0 0.0
        %2252 = vmatpush1.msra.mxu0 0.0
        %2253 = vmatprep.subr.mxu0 0.0
        %2254 = vmatpush1.msra.mxu0 0.0
        %2255 = vmatprep.subr.mxu0 0.0
        %2256 = vmatpush1.msra.mxu0 0.0
        %2257 = vmatprep.subr.mxu0 0.0
        %2258 = vmatpush1.msra.mxu0 0.0
        %2259 = vmatprep.subr.mxu0 0.0
        %2260 = vmatpush1.msra.mxu0 0.0
        %2261 = vmatprep.subr.mxu0 0.0
        %2262 = vmatpush1.msra.mxu0 0.0
        %2263 = vmatprep.subr.mxu0 0.0
        %2264 = vmatpush1.msra.mxu0 0.0
        %2265 = vmatprep.subr.mxu0 0.0
        %2266 = vmatpush1.msra.mxu0 0.0
        %2267 = vmatprep.subr.mxu0 0.0
        %2268 = vmatpush1.msra.mxu0 0.0
        %2269 = vmatprep.subr.mxu0 0.0
        %2270 = vmatpush1.msra.mxu0 0.0
        %2271 = vmatprep.subr.mxu0 0.0
        %2272 = vmatpush1.msra.mxu0 0.0
        %2273 = vmatprep.subr.mxu0 0.0
        %2274 = vmatpush1.msra.mxu0 0.0
        %2275 = vmatprep.subr.mxu0 0.0
        %2276 = vmatpush1.msra.mxu0 0.0
        %2277 = vmatprep.subr.mxu0 0.0
        %2278 = vmatpush1.msra.mxu0 0.0
        %2279 = vmatprep.subr.mxu0 0.0
        %2280 = vmatpush1.msra.mxu0 0.0
        %2281 = vmatprep.subr.mxu0 0.0
        %2282 = vmatpush1.msra.mxu0 0.0
        %2283 = vmatprep.subr.mxu0 0.0
        %2284 = vmatpush1.msra.mxu0 0.0
        %2285 = vmatprep.subr.mxu0 0.0
        %2286 = vmatpush1.msra.mxu0 0.0
        %2287 = vmatprep.subr.mxu0 0.0
        %2288 = vmatpush1.msra.mxu0 0.0
        %2289 = vmatprep.subr.mxu0 0.0
        %2290 = vmatpush1.msra.mxu0 0.0
        %2291 = vmatprep.subr.mxu0 0.0
        %2292 = vmatpush1.msra.mxu0 0.0
        %2293 = vmatprep.subr.mxu0 0.0
        %2294 = vmatpush1.msra.mxu0 0.0
        %2295 = vmatprep.subr.mxu0 0.0
        %2296 = vmatpush1.msra.mxu0 0.0
        %2297 = vmatprep.subr.mxu0 0.0
        %2298 = vmatpush1.msra.mxu0 0.0
        %2299 = vmatprep.subr.mxu0 0.0
        %2300 = vmatpush1.msra.mxu0 0.0
        %2301 = vmatprep.subr.mxu0 0.0
        %2302 = vmatpush1.msra.mxu0 0.0
        %2303 = vmatprep.subr.mxu0 0.0
        %2304 = vmatpush1.msra.mxu0 0.0
        %2305 = vmatprep.mubr.f32.mxu0 0.0
        %v2306 = vand.u32 %v1825, 4294901760
        %2307 = vmatmul.mubr.f32.gmra.mrb[0].mxu0 %v2306
        %v2308 = vpop.f32.mrb[0].mxu0
        %v2309 = vadd.f32 %v2234, %v2308
        %v2310 = vpop.f32.mrb[0].mxu0
        %2311 = vdwg.mxu0
        %2312 = vst [vmem:[%s272] sm:$0x3] %v2309
        %s2313 = sand.u32 %s181, 1
        %s2314 = scalar_lea.sflag [#allocation3], %s2313
        %s2315 = sand.u32 %s181, 1
        %s2316 = smul.addr %s2315, 2
        %s2317 = scalar_lea.vmem [#allocation2], %s2316
        // Predicated region
        $region49: #{tpu_custom_call.1} parent=47 // pred_check
          %p2318 = pneg %p191
        $region50: #{tpu_custom_call.1} parent=47 // pred_check_branch
          %2320 = sbr.rel (%p2318) target = $region52
        $region51: #{tpu_custom_call.1} parent=47 // pred_region
          %s2322 = ssub.s32 32, 32
          %2323 = vsyncadd %s2314, %s2322
          %s2324 = smul.addr %s21, 32
          %s2325 = scalar_lea.hbm %s7, %s2324
          %s2327 = sshll.u32 %s2317, 4
          %s2328 = int_to_ptr.vmem [resolvable:$true] %s2327
          %2330 = dma.vmem_to_hbm [thread:$0]  %s2328, 32, %s2325, %s2314
        $region52: #{tpu_custom_call.1} parent=47 // pred_fallthru
          _
      $region48: #{tpu_custom_call.1} parent=5 // pred_fallthru
        _
      %p2331 = scmp.le.s32.totalorder 2, %s16
      // Predicated region
      $region53: #{tpu_custom_call.1} parent=5 // pred_check
        %p2332 = pneg %p2331
      $region54: #{tpu_custom_call.1} parent=5 // pred_check_branch
        %2334 = sbr.rel (%p2332) target = $region56
      $region55: #{tpu_custom_call.1} parent=5 // pred_region
        %s2335 = ssub.s32 %s16, 2
        // Predicated region
        $region57: #{tpu_custom_call.1} parent=55 // pred_check
          %p2336 = pneg %p197
        $region58: #{tpu_custom_call.1} parent=55 // pred_check_branch
          %2338 = sbr.rel (%p2336) target = $region60
        $region59: #{tpu_custom_call.1} parent=55 // pred_region
          %s2339 = sand.u32 %s182, 1
          %s2340 = scalar_lea.sflag [#allocation3], %s2339
          %s2341 = sand.u32 %s182, 1
          %s2342 = smul.addr %s2341, 2
          %s2343 = scalar_lea.vmem [#allocation2], %s2342
          %2344 = dma.done %s2340, 32
        $region60: #{tpu_custom_call.1} parent=55 // pred_fallthru
          _
      $region56: #{tpu_custom_call.1} parent=5 // pred_fallthru
        _
    $region6: #{tpu_custom_call.1} parent=1 // loop_footer
      %s20 = sadd.s32 1, %s16
    $region7: #{tpu_custom_call.1} parent=1 // loop_footer_branch
      %15 = sbr.rel target = $region3
    $region8: #{tpu_custom_call.1} parent=1 // loop_exit
      _
    %2345 = vsyncpa [#allocation3], 1
    %s2346 = scalar_lea.sflag [#allocation3], 1
    %2347 = vsyncpa %s2346, 1

</llo_original>
